<compile_context>
chip_gen: v7x
topology: tpu7x:2x2x1
jax: 0.10.0
libtpu: 0.0.40
codegen_flags: <defaults>
</compile_context>

<pallas_src>
import functools

import jax
import jax.numpy as jnp
from jax.experimental import pallas as pl
from jax.experimental.pallas import tpu as pltpu

LANE = 128


def _round_up(n, m):
    return ((n + m - 1) // m) * m


def autoencoder_kernel(x_ref,
                       w1_ref, b1_ref,   # Linear(input_dim, 256)
                       w2_ref, b2_ref,   # Linear(256, hidden_dim), N padded to out_w
                       w3_ref, b3_ref,   # Linear(hidden_dim, 256), K padded to out_w
                       w4_ref, b4_ref,   # Linear(256, input_dim), N shifted+padded to out_w
                       out_ref):
    x = x_ref[...].astype(jnp.bfloat16)                         # (TB, input_dim)

    # ----- encoder -----
    h1 = jnp.dot(x, w1_ref[...], preferred_element_type=jnp.float32) + b1_ref[...]
    h1 = jnp.maximum(h1, 0.0)                                   # ReLU (f32, VPU)
    # enc_pad: encoder output in lanes [0, hidden); zeros elsewhere.
    enc_pad = jnp.dot(h1.astype(jnp.bfloat16), w2_ref[...],
                      preferred_element_type=jnp.float32) + b2_ref[...]

    # ----- decoder (latent cast to bf16, same precision path as reference) -----
    h2 = jnp.dot(enc_pad.astype(jnp.bfloat16), w3_ref[...],
                 preferred_element_type=jnp.float32) + b3_ref[...]
    h2 = jnp.maximum(h2, 0.0)                                   # ReLU (f32, VPU)
    # dec_shift: decoder output in lanes [hidden, hidden+input); zeros elsewhere
    # (w4/b4 columns were shifted in the wrapper).
    dec_shift = jnp.dot(h2.astype(jnp.bfloat16), w4_ref[...],
                        preferred_element_type=jnp.float32) + b4_ref[...]

    # Exact packing: the two slabs occupy disjoint lane ranges (rest is zero).
    out_ref[...] = (enc_pad + dec_shift).astype(out_ref.dtype)


@functools.partial(jax.jit, static_argnames=("block_b",))
def autoencoder_forward(x, params, *, block_b=512):
    """x: (B, input_dim) float32. params: (in, out) weights, (1, out) biases."""
    B, input_dim = x.shape
    hidden_dim = params["w2"].shape[1]

    # Packed lane-dense output width: enc at [0,hidden), dec at [hidden, hidden+input).
    out_w = _round_up(hidden_dim + input_dim, LANE)              # 48 -> 128
    b_pad = _round_up(B, block_b)

    f32, bf16 = jnp.float32, jnp.bfloat16

    # x stays unpadded in the feature dim; only batch rows are padded if needed.
    x_p = x if b_pad == B else jnp.pad(x, ((0, b_pad - B), (0, 0)))

    # One-time, tiny weight padding (done once per jit trace, negligible traffic).
    w1 = params["w1"].astype(bf16)                                        # (in, 256)
    b1 = params["b1"].astype(f32)                                         # (1, 256)
    w2 = jnp.pad(params["w2"], ((0, 0), (0, out_w - hidden_dim))).astype(bf16)   # (256, out_w)
    b2 = jnp.pad(params["b2"], ((0, 0), (0, out_w - hidden_dim))).astype(f32)    # (1, out_w)
    w3 = jnp.pad(params["w3"], ((0, out_w - hidden_dim), (0, 0))).astype(bf16)   # (out_w, 256)
    b3 = params["b3"].astype(f32)                                         # (1, 256)
    # Shift decoder output columns to lanes [hidden, hidden+input).
    tail = out_w - hidden_dim - input_dim
    w4 = jnp.pad(params["w4"], ((0, 0), (hidden_dim, tail))).astype(bf16)        # (256, out_w)
    b4 = jnp.pad(params["b4"], ((0, 0), (hidden_dim, tail))).astype(f32)         # (1, out_w)

    grid = (b_pad // block_b,)

    def resident(shape):
        return pl.BlockSpec(shape, lambda i: (0, 0))   # DMA'd once, stays in VMEM

    flops = 2 * b_pad * (input_dim * 256 + 256 * out_w + out_w * 256 + 256 * out_w)
    bytes_accessed = (
        x_p.size * 4
        + (w1.size + w2.size + w3.size + w4.size) * 2
        + (b1.size + b2.size + b3.size + b4.size) * 4
        + b_pad * out_w * 4
    )

    out = pl.pallas_call(
        autoencoder_kernel,
        out_shape=jax.ShapeDtypeStruct((b_pad, out_w), f32),
        grid=grid,
        in_specs=[
            pl.BlockSpec((block_b, input_dim), lambda i: (i, 0)),  # x: pipelined over batch
            resident((input_dim, 256)),                            # w1
            resident((1, 256)),                                    # b1
            resident((256, out_w)),                                # w2
            resident((1, out_w)),                                  # b2
            resident((out_w, 256)),                                # w3
            resident((1, 256)),                                    # b3
            resident((256, out_w)),                                # w4
            resident((1, out_w)),                                  # b4
        ],
        out_specs=pl.BlockSpec((block_b, out_w), lambda i: (i, 0)),
        compiler_params=pltpu.CompilerParams(
            dimension_semantics=("parallel",),                     # v7x: shard over 2 TCs
        ),
        cost_estimate=pl.CostEstimate(
            flops=flops, transcendentals=0, bytes_accessed=bytes_accessed),
    )(x_p, w1, b1, w2, b2, w3, b3, w4, b4)

    enc = out[:B, :hidden_dim]
    dec = out[:B, hidden_dim:hidden_dim + input_dim]
    return enc, dec


def init_params(key, input_dim, hidden_dim):
    """Deterministic synthetic init. Weights stored as (in, out); biases as (1, out)."""
    def linear(key, fan_in, fan_out):
        kw, kb = jax.random.split(key)
        bound = 1.0 / jnp.sqrt(jnp.float32(fan_in))     # PyTorch-style uniform init
        w = jax.random.uniform(kw, (fan_in, fan_out), jnp.float32, -bound, bound)
        b = jax.random.uniform(kb, (1, fan_out), jnp.float32, -bound, bound)
        return w, b

    k1, k2, k3, k4 = jax.random.split(key, 4)
    w1, b1 = linear(k1, input_dim, 256)
    w2, b2 = linear(k2, 256, hidden_dim)
    w3, b3 = linear(k3, hidden_dim, 256)
    w4, b4 = linear(k4, 256, input_dim)
    return dict(w1=w1, b1=b1, w2=w2, b2=b2, w3=w3, b3=b3, w4=w4, b4=b4)


def reference_forward(x, params):
    """Pure-JAX reference on the same precision path (bf16 matmuls, f32 accumulation)."""
    bf16, f32 = jnp.bfloat16, jnp.float32
    h1 = jnp.maximum(
        jnp.dot(x.astype(bf16), params["w1"].astype(bf16),
                preferred_element_type=f32) + params["b1"], 0.0)
    enc = jnp.dot(h1.astype(bf16), params["w2"].astype(bf16),
                  preferred_element_type=f32) + params["b2"]
    h2 = jnp.maximum(
        jnp.dot(enc.astype(bf16), params["w3"].astype(bf16),
                preferred_element_type=f32) + params["b3"], 0.0)
    dec = jnp.dot(h2.astype(bf16), params["w4"].astype(bf16),
                  preferred_element_type=f32) + params["b4"]
    return enc, dec


if __name__ == "__main__":
    key = jax.random.PRNGKey(0)
    k_x, k_p = jax.random.split(key)

    batch = 1000         # pads to 1024 -> 2 parallel grid steps at block_b=512
    input_dim = 32       # features.shape[1] in the original script
    hidden_dim = 16

    x = jax.random.normal(k_x, (batch, input_dim), jnp.float32)
    params = init_params(k_p, input_dim, hidden_dim)

    encoded, decoded = autoencoder_forward(x, params, block_b=512)
    jax.block_until_ready((encoded, decoded))

    assert encoded.shape == (batch, hidden_dim)
    assert decoded.shape == (batch, input_dim)

    enc_ref, dec_ref = reference_forward(x, params)
    assert jnp.allclose(encoded, enc_ref, atol=2e-2, rtol=2e-2), \
        float(jnp.max(jnp.abs(encoded - enc_ref)))
    assert jnp.allclose(decoded, dec_ref, atol=2e-2, rtol=2e-2), \
        float(jnp.max(jnp.abs(decoded - dec_ref)))

    print("KERNEL_OK")
</pallas_src>

<mosaic_0001>
module attributes {stable_mosaic.version = 11 : i64} {
  func.func @autoencoder_kernel(%arg0: i32, %arg1: memref<512x32xf32, #tpu.memory_space<vmem>>, %arg2: memref<32x256xbf16, #tpu.memory_space<vmem>>, %arg3: memref<1x256xf32, #tpu.memory_space<vmem>>, %arg4: memref<256x128xbf16, #tpu.memory_space<vmem>>, %arg5: memref<1x128xf32, #tpu.memory_space<vmem>>, %arg6: memref<128x256xbf16, #tpu.memory_space<vmem>>, %arg7: memref<1x256xf32, #tpu.memory_space<vmem>>, %arg8: memref<256x128xbf16, #tpu.memory_space<vmem>>, %arg9: memref<1x128xf32, #tpu.memory_space<vmem>>, %arg10: memref<512x128xf32, #tpu.memory_space<vmem>>) attributes {dimension_semantics = [#tpu.dimension_semantics<parallel>], iteration_bounds = array<i64: 2>, scalar_prefetch = 0 : i64, scratch_operands = 0 : i64, tpu.core_type = #tpu.core_type<tc>, window_params = [{transform_indices = @transform_0, window_bounds = array<i64: 512, 32>}, {pipeline_mode = #tpu.pipeline_mode<synchronous>, transform_indices = @transform_1, window_bounds = array<i64: 32, 256>}, {pipeline_mode = #tpu.pipeline_mode<synchronous>, transform_indices = @transform_2, window_bounds = array<i64: 1, 256>}, {pipeline_mode = #tpu.pipeline_mode<synchronous>, transform_indices = @transform_3, window_bounds = array<i64: 256, 128>}, {pipeline_mode = #tpu.pipeline_mode<synchronous>, transform_indices = @transform_4, window_bounds = array<i64: 1, 128>}, {pipeline_mode = #tpu.pipeline_mode<synchronous>, transform_indices = @transform_5, window_bounds = array<i64: 128, 256>}, {pipeline_mode = #tpu.pipeline_mode<synchronous>, transform_indices = @transform_6, window_bounds = array<i64: 1, 256>}, {pipeline_mode = #tpu.pipeline_mode<synchronous>, transform_indices = @transform_7, window_bounds = array<i64: 256, 128>}, {pipeline_mode = #tpu.pipeline_mode<synchronous>, transform_indices = @transform_8, window_bounds = array<i64: 1, 128>}, {transform_indices = @transform_9, window_bounds = array<i64: 512, 128>}]} {
    %c0 = arith.constant 0 : index
    %c0_0 = arith.constant 0 : index
    %0 = vector.load %arg1[%c0, %c0_0] : memref<512x32xf32, #tpu.memory_space<vmem>>, vector<512x32xf32>
    %1 = arith.truncf %0 : vector<512x32xf32> to vector<512x32xbf16>
    %c0_1 = arith.constant 0 : index
    %c0_2 = arith.constant 0 : index
    %2 = vector.load %arg2[%c0_1, %c0_2] : memref<32x256xbf16, #tpu.memory_space<vmem>>, vector<32x256xbf16>
    %cst = arith.constant dense<0.000000e+00> : vector<512x256xf32>
    %3 = tpu.matmul %1, %2, %cst {dimension_numbers = #tpu.dot_dimension_numbers<[1], [0], [0], [1], [0, 0, 1, 1], [], []>} : vector<512x32xbf16>, vector<32x256xbf16>, vector<512x256xf32> -> vector<512x256xf32>
    %c0_3 = arith.constant 0 : index
    %c0_4 = arith.constant 0 : index
    %4 = vector.load %arg3[%c0_3, %c0_4] : memref<1x256xf32, #tpu.memory_space<vmem>>, vector<1x256xf32>
    %5 = vector.broadcast %4 : vector<1x256xf32> to vector<512x256xf32>
    %6 = arith.addf %3, %5 : vector<512x256xf32>
    %cst_5 = arith.constant 0.000000e+00 : f32
    %7 = vector.broadcast %cst_5 : f32 to vector<512x256xf32>
    %8 = arith.maximumf %6, %7 : vector<512x256xf32>
    %9 = arith.truncf %8 : vector<512x256xf32> to vector<512x256xbf16>
    %c0_6 = arith.constant 0 : index
    %c0_7 = arith.constant 0 : index
    %10 = vector.load %arg4[%c0_6, %c0_7] : memref<256x128xbf16, #tpu.memory_space<vmem>>, vector<256x128xbf16>
    %cst_8 = arith.constant dense<0.000000e+00> : vector<512x128xf32>
    %11 = tpu.matmul %9, %10, %cst_8 {dimension_numbers = #tpu.dot_dimension_numbers<[1], [0], [0], [1], [0, 0, 1, 1], [], []>} : vector<512x256xbf16>, vector<256x128xbf16>, vector<512x128xf32> -> vector<512x128xf32>
    %c0_9 = arith.constant 0 : index
    %c0_10 = arith.constant 0 : index
    %12 = vector.load %arg5[%c0_9, %c0_10] : memref<1x128xf32, #tpu.memory_space<vmem>>, vector<1x128xf32>
    %13 = vector.broadcast %12 : vector<1x128xf32> to vector<512x128xf32>
    %14 = arith.addf %11, %13 : vector<512x128xf32>
    %15 = arith.truncf %14 : vector<512x128xf32> to vector<512x128xbf16>
    %c0_11 = arith.constant 0 : index
    %c0_12 = arith.constant 0 : index
    %16 = vector.load %arg6[%c0_11, %c0_12] : memref<128x256xbf16, #tpu.memory_space<vmem>>, vector<128x256xbf16>
    %cst_13 = arith.constant dense<0.000000e+00> : vector<512x256xf32>
    %17 = tpu.matmul %15, %16, %cst_13 {dimension_numbers = #tpu.dot_dimension_numbers<[1], [0], [0], [1], [0, 0, 1, 1], [], []>} : vector<512x128xbf16>, vector<128x256xbf16>, vector<512x256xf32> -> vector<512x256xf32>
    %c0_14 = arith.constant 0 : index
    %c0_15 = arith.constant 0 : index
    %18 = vector.load %arg7[%c0_14, %c0_15] : memref<1x256xf32, #tpu.memory_space<vmem>>, vector<1x256xf32>
    %19 = vector.broadcast %18 : vector<1x256xf32> to vector<512x256xf32>
    %20 = arith.addf %17, %19 : vector<512x256xf32>
    %cst_16 = arith.constant 0.000000e+00 : f32
    %21 = vector.broadcast %cst_16 : f32 to vector<512x256xf32>
    %22 = arith.maximumf %20, %21 : vector<512x256xf32>
    %23 = arith.truncf %22 : vector<512x256xf32> to vector<512x256xbf16>
    %c0_17 = arith.constant 0 : index
    %c0_18 = arith.constant 0 : index
    %24 = vector.load %arg8[%c0_17, %c0_18] : memref<256x128xbf16, #tpu.memory_space<vmem>>, vector<256x128xbf16>
    %cst_19 = arith.constant dense<0.000000e+00> : vector<512x128xf32>
    %25 = tpu.matmul %23, %24, %cst_19 {dimension_numbers = #tpu.dot_dimension_numbers<[1], [0], [0], [1], [0, 0, 1, 1], [], []>} : vector<512x256xbf16>, vector<256x128xbf16>, vector<512x128xf32> -> vector<512x128xf32>
    %c0_20 = arith.constant 0 : index
    %c0_21 = arith.constant 0 : index
    %26 = vector.load %arg9[%c0_20, %c0_21] : memref<1x128xf32, #tpu.memory_space<vmem>>, vector<1x128xf32>
    %27 = vector.broadcast %26 : vector<1x128xf32> to vector<512x128xf32>
    %28 = arith.addf %25, %27 : vector<512x128xf32>
    %29 = arith.addf %14, %28 : vector<512x128xf32>
    %c0_22 = arith.constant 0 : index
    %c0_23 = arith.constant 0 : index
    %30 = vector.load %arg10[%c0_22, %c0_23] : memref<512x128xf32, #tpu.memory_space<vmem>>, vector<512x128xf32>
    tpu.vector_store %arg10[%c0_22, %c0_23], %29 {strides = array<i32>} : memref<512x128xf32, #tpu.memory_space<vmem>>, vector<512x128xf32>,
    return
  }
  func.func @transform_0(%arg0: i32) -> (i32, i32) {
    %c0_i32 = arith.constant 0 : i32
    %c0_i32_0 = arith.constant 0 : i32
    return %arg0, %c0_i32 : i32, i32
  }
  func.func @transform_1(%arg0: i32) -> (i32, i32) {
    %c0_i32 = arith.constant 0 : i32
    %c0_i32_0 = arith.constant 0 : i32
    %c0_i32_1 = arith.constant 0 : i32
    return %c0_i32, %c0_i32_0 : i32, i32
  }
  func.func @transform_2(%arg0: i32) -> (i32, i32) {
    %c0_i32 = arith.constant 0 : i32
    %c0_i32_0 = arith.constant 0 : i32
    %c0_i32_1 = arith.constant 0 : i32
    return %c0_i32, %c0_i32_0 : i32, i32
  }
  func.func @transform_3(%arg0: i32) -> (i32, i32) {
    %c0_i32 = arith.constant 0 : i32
    %c0_i32_0 = arith.constant 0 : i32
    %c0_i32_1 = arith.constant 0 : i32
    return %c0_i32, %c0_i32_0 : i32, i32
  }
  func.func @transform_4(%arg0: i32) -> (i32, i32) {
    %c0_i32 = arith.constant 0 : i32
    %c0_i32_0 = arith.constant 0 : i32
    %c0_i32_1 = arith.constant 0 : i32
    return %c0_i32, %c0_i32_0 : i32, i32
  }
  func.func @transform_5(%arg0: i32) -> (i32, i32) {
    %c0_i32 = arith.constant 0 : i32
    %c0_i32_0 = arith.constant 0 : i32
    %c0_i32_1 = arith.constant 0 : i32
    return %c0_i32, %c0_i32_0 : i32, i32
  }
  func.func @transform_6(%arg0: i32) -> (i32, i32) {
    %c0_i32 = arith.constant 0 : i32
    %c0_i32_0 = arith.constant 0 : i32
    %c0_i32_1 = arith.constant 0 : i32
    return %c0_i32, %c0_i32_0 : i32, i32
  }
  func.func @transform_7(%arg0: i32) -> (i32, i32) {
    %c0_i32 = arith.constant 0 : i32
    %c0_i32_0 = arith.constant 0 : i32
    %c0_i32_1 = arith.constant 0 : i32
    return %c0_i32, %c0_i32_0 : i32, i32
  }
  func.func @transform_8(%arg0: i32) -> (i32, i32) {
    %c0_i32 = arith.constant 0 : i32
    %c0_i32_0 = arith.constant 0 : i32
    %c0_i32_1 = arith.constant 0 : i32
    return %c0_i32, %c0_i32_0 : i32, i32
  }
  func.func @transform_9(%arg0: i32) -> (i32, i32) {
    %c0_i32 = arith.constant 0 : i32
    %c0_i32_0 = arith.constant 0 : i32
    return %arg0, %c0_i32 : i32, i32
  }
}

</mosaic_0001>

<llo_original>
// kernel: autoencoder_forward.1
$region0: #{autoencoder_forward.1}
  #allocation0 [shape = 'u32[]', space=smem, size = 0x4, offset = 0x4, fixed_abs, tag = 'smem constant byte address 0x4 - core index']
  #allocation1 [shape = 'u32[144,128]{1,0:T(1,128)}', space=vmem, size = 0x12000, scoped, tag = 'internal scratch']
  %s0 = inlined_call_operand.vmem [shape: f32[1024,32], index: 0, kind: input, shape index: {}]
  %s1 = inlined_call_operand.vmem [shape: bf16[32,256], index: 1, kind: input, shape index: {}]
  %s2 = inlined_call_operand.vmem [shape: f32[1,256], index: 2, kind: input, shape index: {}]
  %s3 = inlined_call_operand.vmem [shape: bf16[256,128], index: 3, kind: input, shape index: {}]
  %s4 = inlined_call_operand.vmem [shape: f32[1,128], index: 4, kind: input, shape index: {}]
  %s5 = inlined_call_operand.vmem [shape: bf16[128,256], index: 5, kind: input, shape index: {}]
  %s6 = inlined_call_operand.vmem [shape: f32[1,256], index: 6, kind: input, shape index: {}]
  %s7 = inlined_call_operand.vmem [shape: bf16[256,128], index: 7, kind: input, shape index: {}]
  %s8 = inlined_call_operand.vmem [shape: f32[1,128], index: 8, kind: input, shape index: {}]
  %s9 = inlined_call_operand.vmem [shape: f32[1024,128], index: 9, kind: output, shape index: {}]
  %s10 = sld [smem:[#allocation0]]
  $region69: #{autoencoder_forward.1} parent=0
    _
  %s12 = ssub.s32 1, %s10
  %s13 = scalar_select 0, %s12, %s10
  loop: start=0, step=1, limit=4
  $region2: #{autoencoder_forward.1} parent=0 // loop_pre_header
    _
  $region3: #{autoencoder_forward.1} parent=0 // loop_header
    %s15 = sphi 0, %s19
    %p16 = scmp.ge.s32.totalorder %s15, 4
    %s25 = sphi 0, %s27
    %s28 = sphi 0, %s25
    %s29 = sphi 0, %s28
    %s45 = sphi 0, %s29
    %s49 = sphi 0, %s49
    %s51 = sphi 0, %s49
    %s52 = sphi 0, %s51
    %s66 = sphi 0, %s52
    %s70 = sphi 0, %s70
    %s72 = sphi 0, %s70
    %s73 = sphi 0, %s72
    %s87 = sphi 0, %s73
    %s91 = sphi 0, %s91
    %s93 = sphi 0, %s91
    %s94 = sphi 0, %s93
    %s108 = sphi 0, %s94
    %s112 = sphi 0, %s112
    %s114 = sphi 0, %s112
    %s115 = sphi 0, %s114
    %s129 = sphi 0, %s115
    %s133 = sphi 0, %s133
    %s135 = sphi 0, %s133
    %s136 = sphi 0, %s135
    %s150 = sphi 0, %s136
    %s154 = sphi 0, %s154
    %s156 = sphi 0, %s154
    %s157 = sphi 0, %s156
    %s171 = sphi 0, %s157
    %s175 = sphi 0, %s175
    %s177 = sphi 0, %s175
    %s178 = sphi 0, %s177
    %s192 = sphi 0, %s178
    %s196 = sphi 0, %s196
    %s198 = sphi 0, %s196
    %s199 = sphi 0, %s198
    %s213 = sphi 0, %s199
    %s219 = sphi 0, %s221
    %s222 = sphi 0, %s219
    %s223 = sphi 0, %s222
    %s239 = sphi 0, %s223
  $region4: #{autoencoder_forward.1} parent=0 // loop_header_branch
    %18 = sbr.rel (%p16) target = $region8
  $region5: #{autoencoder_forward.1} parent=0 // loop_body
    %s20 = ssub.s32 %s15, 1
    %s21 = ssub.s32 %s15, 2
    %s22 = sadd.s32 %s15, 1
    %s23 = ssub.s32 %s15, %s22
    %p24 = scmp.eq.s32.totalorder %s23, 0
    %s26 = sadd.s32 %s25, 1
    %s27 = scalar_select %p24, %s25, %s26
    %p30 = pneg %p24
    %p31 = scmp.eq.s32.totalorder %s15, 1
    %p32 = por %p30, %p31
    %p33 = scmp.ne.s32.totalorder %s25, %s28
    %p34 = scmp.eq.s32.totalorder %s15, 0
    %p35 = por %p33, %p34
    %p36 = scmp.ne.s32.totalorder %s25, %s28
    %p37 = scmp.eq.s32.totalorder %s20, 1
    %p38 = por %p36, %p37
    %p39 = scmp.ne.s32.totalorder %s28, %s29
    %p40 = scmp.eq.s32.totalorder %s20, 0
    %p41 = por %p39, %p40
    %p42 = scmp.ne.s32.totalorder %s28, %s29
    %p43 = scmp.eq.s32.totalorder %s21, 1
    %p44 = por %p42, %p43
    %p46 = scmp.ne.s32.totalorder %s29, %s45
    %p47 = scmp.eq.s32.totalorder %s21, 0
    %p48 = por %p46, %p47
    %s50 = sadd.s32 %s49, 1
    %p53 = scmp.eq.s32.totalorder %s15, 1
    %p54 = scmp.ne.s32.totalorder %s49, %s51
    %p55 = scmp.eq.s32.totalorder %s15, 0
    %p56 = por %p54, %p55
    %p57 = scmp.ne.s32.totalorder %s49, %s51
    %p58 = scmp.eq.s32.totalorder %s20, 1
    %p59 = por %p57, %p58
    %p60 = scmp.ne.s32.totalorder %s51, %s52
    %p61 = scmp.eq.s32.totalorder %s20, 0
    %p62 = por %p60, %p61
    %p63 = scmp.ne.s32.totalorder %s51, %s52
    %p64 = scmp.eq.s32.totalorder %s21, 1
    %p65 = por %p63, %p64
    %p67 = scmp.ne.s32.totalorder %s52, %s66
    %p68 = scmp.eq.s32.totalorder %s21, 0
    %p69 = por %p67, %p68
    %s71 = sadd.s32 %s70, 1
    %p74 = scmp.eq.s32.totalorder %s15, 1
    %p75 = scmp.ne.s32.totalorder %s70, %s72
    %p76 = scmp.eq.s32.totalorder %s15, 0
    %p77 = por %p75, %p76
    %p78 = scmp.ne.s32.totalorder %s70, %s72
    %p79 = scmp.eq.s32.totalorder %s20, 1
    %p80 = por %p78, %p79
    %p81 = scmp.ne.s32.totalorder %s72, %s73
    %p82 = scmp.eq.s32.totalorder %s20, 0
    %p83 = por %p81, %p82
    %p84 = scmp.ne.s32.totalorder %s72, %s73
    %p85 = scmp.eq.s32.totalorder %s21, 1
    %p86 = por %p84, %p85
    %p88 = scmp.ne.s32.totalorder %s73, %s87
    %p89 = scmp.eq.s32.totalorder %s21, 0
    %p90 = por %p88, %p89
    %s92 = sadd.s32 %s91, 1
    %p95 = scmp.eq.s32.totalorder %s15, 1
    %p96 = scmp.ne.s32.totalorder %s91, %s93
    %p97 = scmp.eq.s32.totalorder %s15, 0
    %p98 = por %p96, %p97
    %p99 = scmp.ne.s32.totalorder %s91, %s93
    %p100 = scmp.eq.s32.totalorder %s20, 1
    %p101 = por %p99, %p100
    %p102 = scmp.ne.s32.totalorder %s93, %s94
    %p103 = scmp.eq.s32.totalorder %s20, 0
    %p104 = por %p102, %p103
    %p105 = scmp.ne.s32.totalorder %s93, %s94
    %p106 = scmp.eq.s32.totalorder %s21, 1
    %p107 = por %p105, %p106
    %p109 = scmp.ne.s32.totalorder %s94, %s108
    %p110 = scmp.eq.s32.totalorder %s21, 0
    %p111 = por %p109, %p110
    %s113 = sadd.s32 %s112, 1
    %p116 = scmp.eq.s32.totalorder %s15, 1
    %p117 = scmp.ne.s32.totalorder %s112, %s114
    %p118 = scmp.eq.s32.totalorder %s15, 0
    %p119 = por %p117, %p118
    %p120 = scmp.ne.s32.totalorder %s112, %s114
    %p121 = scmp.eq.s32.totalorder %s20, 1
    %p122 = por %p120, %p121
    %p123 = scmp.ne.s32.totalorder %s114, %s115
    %p124 = scmp.eq.s32.totalorder %s20, 0
    %p125 = por %p123, %p124
    %p126 = scmp.ne.s32.totalorder %s114, %s115
    %p127 = scmp.eq.s32.totalorder %s21, 1
    %p128 = por %p126, %p127
    %p130 = scmp.ne.s32.totalorder %s115, %s129
    %p131 = scmp.eq.s32.totalorder %s21, 0
    %p132 = por %p130, %p131
    %s134 = sadd.s32 %s133, 1
    %p137 = scmp.eq.s32.totalorder %s15, 1
    %p138 = scmp.ne.s32.totalorder %s133, %s135
    %p139 = scmp.eq.s32.totalorder %s15, 0
    %p140 = por %p138, %p139
    %p141 = scmp.ne.s32.totalorder %s133, %s135
    %p142 = scmp.eq.s32.totalorder %s20, 1
    %p143 = por %p141, %p142
    %p144 = scmp.ne.s32.totalorder %s135, %s136
    %p145 = scmp.eq.s32.totalorder %s20, 0
    %p146 = por %p144, %p145
    %p147 = scmp.ne.s32.totalorder %s135, %s136
    %p148 = scmp.eq.s32.totalorder %s21, 1
    %p149 = por %p147, %p148
    %p151 = scmp.ne.s32.totalorder %s136, %s150
    %p152 = scmp.eq.s32.totalorder %s21, 0
    %p153 = por %p151, %p152
    %s155 = sadd.s32 %s154, 1
    %p158 = scmp.eq.s32.totalorder %s15, 1
    %p159 = scmp.ne.s32.totalorder %s154, %s156
    %p160 = scmp.eq.s32.totalorder %s15, 0
    %p161 = por %p159, %p160
    %p162 = scmp.ne.s32.totalorder %s154, %s156
    %p163 = scmp.eq.s32.totalorder %s20, 1
    %p164 = por %p162, %p163
    %p165 = scmp.ne.s32.totalorder %s156, %s157
    %p166 = scmp.eq.s32.totalorder %s20, 0
    %p167 = por %p165, %p166
    %p168 = scmp.ne.s32.totalorder %s156, %s157
    %p169 = scmp.eq.s32.totalorder %s21, 1
    %p170 = por %p168, %p169
    %p172 = scmp.ne.s32.totalorder %s157, %s171
    %p173 = scmp.eq.s32.totalorder %s21, 0
    %p174 = por %p172, %p173
    %s176 = sadd.s32 %s175, 1
    %p179 = scmp.eq.s32.totalorder %s15, 1
    %p180 = scmp.ne.s32.totalorder %s175, %s177
    %p181 = scmp.eq.s32.totalorder %s15, 0
    %p182 = por %p180, %p181
    %p183 = scmp.ne.s32.totalorder %s175, %s177
    %p184 = scmp.eq.s32.totalorder %s20, 1
    %p185 = por %p183, %p184
    %p186 = scmp.ne.s32.totalorder %s177, %s178
    %p187 = scmp.eq.s32.totalorder %s20, 0
    %p188 = por %p186, %p187
    %p189 = scmp.ne.s32.totalorder %s177, %s178
    %p190 = scmp.eq.s32.totalorder %s21, 1
    %p191 = por %p189, %p190
    %p193 = scmp.ne.s32.totalorder %s178, %s192
    %p194 = scmp.eq.s32.totalorder %s21, 0
    %p195 = por %p193, %p194
    %s197 = sadd.s32 %s196, 1
    %p200 = scmp.eq.s32.totalorder %s15, 1
    %p201 = scmp.ne.s32.totalorder %s196, %s198
    %p202 = scmp.eq.s32.totalorder %s15, 0
    %p203 = por %p201, %p202
    %p204 = scmp.ne.s32.totalorder %s196, %s198
    %p205 = scmp.eq.s32.totalorder %s20, 1
    %p206 = por %p204, %p205
    %p207 = scmp.ne.s32.totalorder %s198, %s199
    %p208 = scmp.eq.s32.totalorder %s20, 0
    %p209 = por %p207, %p208
    %p210 = scmp.ne.s32.totalorder %s198, %s199
    %p211 = scmp.eq.s32.totalorder %s21, 1
    %p212 = por %p210, %p211
    %p214 = scmp.ne.s32.totalorder %s199, %s213
    %p215 = scmp.eq.s32.totalorder %s21, 0
    %p216 = por %p214, %p215
    %s217 = ssub.s32 %s15, %s22
    %p218 = scmp.eq.s32.totalorder %s217, 0
    %s220 = sadd.s32 %s219, 1
    %s221 = scalar_select %p218, %s219, %s220
    %p224 = pneg %p218
    %p225 = scmp.eq.s32.totalorder %s15, 1
    %p226 = por %p224, %p225
    %p227 = scmp.ne.s32.totalorder %s219, %s222
    %p228 = scmp.eq.s32.totalorder %s15, 0
    %p229 = por %p227, %p228
    %p230 = scmp.ne.s32.totalorder %s219, %s222
    %p231 = scmp.eq.s32.totalorder %s20, 1
    %p232 = por %p230, %p231
    %p233 = scmp.ne.s32.totalorder %s222, %s223
    %p234 = scmp.eq.s32.totalorder %s20, 0
    %p235 = por %p233, %p234
    %p236 = scmp.ne.s32.totalorder %s222, %s223
    %p237 = scmp.eq.s32.totalorder %s21, 1
    %p238 = por %p236, %p237
    %p240 = scmp.ne.s32.totalorder %s223, %s239
    %p241 = scmp.eq.s32.totalorder %s21, 0
    %p242 = por %p240, %p241
    %p243 = scmp.le.s32.totalorder 1, %s15
    %p244 = scmp.lt.s32.totalorder %s15, 3
    %p245 = pnand %p243, %p244
    %p246 = pneg %p245
    // Predicated region
    $region9: #{autoencoder_forward.1} parent=5 // pred_check
      _
    $region10: #{autoencoder_forward.1} parent=5 // pred_check_branch
      %248 = sbr.rel (%p245) target = $region12
    $region11: #{autoencoder_forward.1} parent=5 // pred_region
      %s249 = ssub.s32 %s15, 1
      // Predicated region
      $region13: #{autoencoder_forward.1} parent=11 // pred_check
        %p250 = pneg %p62
      $region14: #{autoencoder_forward.1} parent=11 // pred_check_branch
        %252 = sbr.rel (%p250) target = $region16
      $region15: #{autoencoder_forward.1} parent=11 // pred_region
        _
      $region16: #{autoencoder_forward.1} parent=11 // pred_fallthru
        _
      // Predicated region
      $region17: #{autoencoder_forward.1} parent=11 // pred_check
        %p253 = pneg %p83
      $region18: #{autoencoder_forward.1} parent=11 // pred_check_branch
        %255 = sbr.rel (%p253) target = $region20
      $region19: #{autoencoder_forward.1} parent=11 // pred_region
        _
      $region20: #{autoencoder_forward.1} parent=11 // pred_fallthru
        _
      // Predicated region
      $region21: #{autoencoder_forward.1} parent=11 // pred_check
        %p256 = pneg %p104
      $region22: #{autoencoder_forward.1} parent=11 // pred_check_branch
        %258 = sbr.rel (%p256) target = $region24
      $region23: #{autoencoder_forward.1} parent=11 // pred_region
        _
      $region24: #{autoencoder_forward.1} parent=11 // pred_fallthru
        _
      // Predicated region
      $region25: #{autoencoder_forward.1} parent=11 // pred_check
        %p259 = pneg %p125
      $region26: #{autoencoder_forward.1} parent=11 // pred_check_branch
        %261 = sbr.rel (%p259) target = $region28
      $region27: #{autoencoder_forward.1} parent=11 // pred_region
        _
      $region28: #{autoencoder_forward.1} parent=11 // pred_fallthru
        _
      // Predicated region
      $region29: #{autoencoder_forward.1} parent=11 // pred_check
        %p262 = pneg %p146
      $region30: #{autoencoder_forward.1} parent=11 // pred_check_branch
        %264 = sbr.rel (%p262) target = $region32
      $region31: #{autoencoder_forward.1} parent=11 // pred_region
        _
      $region32: #{autoencoder_forward.1} parent=11 // pred_fallthru
        _
      // Predicated region
      $region33: #{autoencoder_forward.1} parent=11 // pred_check
        %p265 = pneg %p167
      $region34: #{autoencoder_forward.1} parent=11 // pred_check_branch
        %267 = sbr.rel (%p265) target = $region36
      $region35: #{autoencoder_forward.1} parent=11 // pred_region
        _
      $region36: #{autoencoder_forward.1} parent=11 // pred_fallthru
        _
      // Predicated region
      $region37: #{autoencoder_forward.1} parent=11 // pred_check
        %p268 = pneg %p188
      $region38: #{autoencoder_forward.1} parent=11 // pred_check_branch
        %270 = sbr.rel (%p268) target = $region40
      $region39: #{autoencoder_forward.1} parent=11 // pred_region
        _
      $region40: #{autoencoder_forward.1} parent=11 // pred_fallthru
        _
      // Predicated region
      $region41: #{autoencoder_forward.1} parent=11 // pred_check
        %p271 = pneg %p209
      $region42: #{autoencoder_forward.1} parent=11 // pred_check_branch
        %273 = sbr.rel (%p271) target = $region44
      $region43: #{autoencoder_forward.1} parent=11 // pred_region
        _
      $region44: #{autoencoder_forward.1} parent=11 // pred_fallthru
        _
    $region12: #{autoencoder_forward.1} parent=5 // pred_fallthru
      _
    %p274 = scmp.lt.s32.totalorder %s15, 2
    // Predicated region
    $region45: #{autoencoder_forward.1} parent=5 // pred_check
      %p275 = pneg %p274
    $region46: #{autoencoder_forward.1} parent=5 // pred_check_branch
      %277 = sbr.rel (%p275) target = $region48
    $region47: #{autoencoder_forward.1} parent=5 // pred_region
      // Predicated region
      $region49: #{autoencoder_forward.1} parent=47 // pred_check
        %p278 = pneg %p35
      $region50: #{autoencoder_forward.1} parent=47 // pred_check_branch
        %280 = sbr.rel (%p278) target = $region52
      $region51: #{autoencoder_forward.1} parent=47 // pred_region
        %s281 = smul.u32 64, %s15
        %p282 = scmp.lt.s32.totalorder %s281, 127
        %s283 = scalar_select %p282, %s281, 127
        %s284 = smul.addr %s283, 8
        %s285 = scalar_lea.vmem %s0, %s284
        %s286 = smul.u32 64, %s15
      $region52: #{autoencoder_forward.1} parent=47 // pred_fallthru
        _
    $region48: #{autoencoder_forward.1} parent=5 // pred_fallthru
      _
    %p287 = scmp.le.s32.totalorder 1, %s15
    %p288 = scmp.lt.s32.totalorder %s15, 3
    %p289 = pnand %p287, %p288
    %p290 = pneg %p289
    // Predicated region
    $region53: #{autoencoder_forward.1} parent=5 // pred_check
      _
    $region54: #{autoencoder_forward.1} parent=5 // pred_check_branch
      %292 = sbr.rel (%p289) target = $region56
    $region55: #{autoencoder_forward.1} parent=5 // pred_region
      %s293 = ssub.s32 %s15, 1
      %s294 = smul.u32 64, %s20
      %p295 = scmp.lt.s32.totalorder %s294, 127
      %s296 = scalar_select %p295, %s294, 127
      %s297 = smul.addr %s296, 8
      %s298 = scalar_lea.vmem %s0, %s297
      %p299 = pneg %p41
      %p300 = pneg %p38
      %p301 = pneg %p62
      %p302 = pneg %p59
      %p303 = pneg %p83
      %p304 = pneg %p80
      %p305 = pneg %p104
      %p306 = pneg %p101
      %p307 = pneg %p125
      %p308 = pneg %p122
      %p309 = pneg %p146
      %p310 = pneg %p143
      %p311 = pneg %p167
      %p312 = pneg %p164
      %p313 = pneg %p188
      %p314 = pneg %p185
      %p315 = pneg %p209
      %p316 = pneg %p206
      %p317 = pneg %p235
      %p318 = pneg %p232
      %s319 = smul.u32 64, %s20
      %p320 = scmp.lt.s32.totalorder %s319, 127
      %s321 = scalar_select %p320, %s319, 127
      %s322 = smul.addr %s321, 8
      %s323 = scalar_lea.vmem %s9, %s322
      %s324 = smul.u32 64, %s20
      %p325 = scmp.lt.s32.totalorder %s324, 127
      %s326 = scalar_select %p325, %s324, 127
      %s327 = smul.addr %s326, 8
      %s328 = scalar_lea.vmem %s0, %s327
      %s329 = smul.u32 64, %s20
      %s330 = smul.u32 64, %s20
      %p331 = scmp.lt.s32.totalorder %s330, 127
      %s332 = scalar_select %p331, %s330, 127
      %s333 = smul.addr %s332, 8
      %s334 = scalar_lea.vmem %s9, %s333
      %s335 = smul.u32 64, %s20
      %v337 = vld [vmem:[%s328] sm:$0xff]
      %v338 = vld [vmem:[%s328 + $0x8] sm:$0xff]
      %v339 = vld [vmem:[%s328 + $0x10] sm:$0xff]
      %v340 = vld [vmem:[%s328 + $0x18] sm:$0xff]
      %v341 = vld [vmem:[%s328 + $0x20] sm:$0xff]
      %v342 = vld [vmem:[%s328 + $0x28] sm:$0xff]
      %v343 = vld [vmem:[%s328 + $0x30] sm:$0xff]
      %v344 = vld [vmem:[%s328 + $0x38] sm:$0xff]
      %v345 = vld [vmem:[%s328 + $0x40] sm:$0xff]
      %v346 = vld [vmem:[%s328 + $0x48] sm:$0xff]
      %v347 = vld [vmem:[%s328 + $0x50] sm:$0xff]
      %v348 = vld [vmem:[%s328 + $0x58] sm:$0xff]
      %v349 = vld [vmem:[%s328 + $0x60] sm:$0xff]
      %v350 = vld [vmem:[%s328 + $0x68] sm:$0xff]
      %v351 = vld [vmem:[%s328 + $0x70] sm:$0xff]
      %v352 = vld [vmem:[%s328 + $0x78] sm:$0xff]
      %v353 = vld [vmem:[%s328 + $0x80] sm:$0xff]
      %v354 = vld [vmem:[%s328 + $0x88] sm:$0xff]
      %v355 = vld [vmem:[%s328 + $0x90] sm:$0xff]
      %v356 = vld [vmem:[%s328 + $0x98] sm:$0xff]
      %v357 = vld [vmem:[%s328 + $0xa0] sm:$0xff]
      %v358 = vld [vmem:[%s328 + $0xa8] sm:$0xff]
      %v359 = vld [vmem:[%s328 + $0xb0] sm:$0xff]
      %v360 = vld [vmem:[%s328 + $0xb8] sm:$0xff]
      %v361 = vld [vmem:[%s328 + $0xc0] sm:$0xff]
      %v362 = vld [vmem:[%s328 + $0xc8] sm:$0xff]
      %v363 = vld [vmem:[%s328 + $0xd0] sm:$0xff]
      %v364 = vld [vmem:[%s328 + $0xd8] sm:$0xff]
      %v365 = vld [vmem:[%s328 + $0xe0] sm:$0xff]
      %v366 = vld [vmem:[%s328 + $0xe8] sm:$0xff]
      %v367 = vld [vmem:[%s328 + $0xf0] sm:$0xff]
      %v368 = vld [vmem:[%s328 + $0xf8] sm:$0xff]
      %v369 = vld [vmem:[%s328 + $0x100] sm:$0xff]
      %v370 = vld [vmem:[%s328 + $0x108] sm:$0xff]
      %v371 = vld [vmem:[%s328 + $0x110] sm:$0xff]
      %v372 = vld [vmem:[%s328 + $0x118] sm:$0xff]
      %v373 = vld [vmem:[%s328 + $0x120] sm:$0xff]
      %v374 = vld [vmem:[%s328 + $0x128] sm:$0xff]
      %v375 = vld [vmem:[%s328 + $0x130] sm:$0xff]
      %v376 = vld [vmem:[%s328 + $0x138] sm:$0xff]
      %v377 = vld [vmem:[%s328 + $0x140] sm:$0xff]
      %v378 = vld [vmem:[%s328 + $0x148] sm:$0xff]
      %v379 = vld [vmem:[%s328 + $0x150] sm:$0xff]
      %v380 = vld [vmem:[%s328 + $0x158] sm:$0xff]
      %v381 = vld [vmem:[%s328 + $0x160] sm:$0xff]
      %v382 = vld [vmem:[%s328 + $0x168] sm:$0xff]
      %v383 = vld [vmem:[%s328 + $0x170] sm:$0xff]
      %v384 = vld [vmem:[%s328 + $0x178] sm:$0xff]
      %v385 = vld [vmem:[%s328 + $0x180] sm:$0xff]
      %v386 = vld [vmem:[%s328 + $0x188] sm:$0xff]
      %v387 = vld [vmem:[%s328 + $0x190] sm:$0xff]
      %v388 = vld [vmem:[%s328 + $0x198] sm:$0xff]
      %v389 = vld [vmem:[%s328 + $0x1a0] sm:$0xff]
      %v390 = vld [vmem:[%s328 + $0x1a8] sm:$0xff]
      %v391 = vld [vmem:[%s328 + $0x1b0] sm:$0xff]
      %v392 = vld [vmem:[%s328 + $0x1b8] sm:$0xff]
      %v393 = vld [vmem:[%s328 + $0x1c0] sm:$0xff]
      %v394 = vld [vmem:[%s328 + $0x1c8] sm:$0xff]
      %v395 = vld [vmem:[%s328 + $0x1d0] sm:$0xff]
      %v396 = vld [vmem:[%s328 + $0x1d8] sm:$0xff]
      %v397 = vld [vmem:[%s328 + $0x1e0] sm:$0xff]
      %v398 = vld [vmem:[%s328 + $0x1e8] sm:$0xff]
      %v399 = vld [vmem:[%s328 + $0x1f0] sm:$0xff]
      %v400 = vld [vmem:[%s328 + $0x1f8] sm:$0xff]
      %v401 = vpack.c.bf16 %v338, %v337
      %v402 = vpack.c.bf16 %v340, %v339
      %v403 = vpack.c.bf16 %v342, %v341
      %v404 = vpack.c.bf16 %v344, %v343
      %v405 = vpack.c.bf16 %v346, %v345
      %v406 = vpack.c.bf16 %v348, %v347
      %v407 = vpack.c.bf16 %v350, %v349
      %v408 = vpack.c.bf16 %v352, %v351
      %v409 = vpack.c.bf16 %v354, %v353
      %v410 = vpack.c.bf16 %v356, %v355
      %v411 = vpack.c.bf16 %v358, %v357
      %v412 = vpack.c.bf16 %v360, %v359
      %v413 = vpack.c.bf16 %v362, %v361
      %v414 = vpack.c.bf16 %v364, %v363
      %v415 = vpack.c.bf16 %v366, %v365
      %v416 = vpack.c.bf16 %v368, %v367
      %v417 = vpack.c.bf16 %v370, %v369
      %v418 = vpack.c.bf16 %v372, %v371
      %v419 = vpack.c.bf16 %v374, %v373
      %v420 = vpack.c.bf16 %v376, %v375
      %v421 = vpack.c.bf16 %v378, %v377
      %v422 = vpack.c.bf16 %v380, %v379
      %v423 = vpack.c.bf16 %v382, %v381
      %v424 = vpack.c.bf16 %v384, %v383
      %v425 = vpack.c.bf16 %v386, %v385
      %v426 = vpack.c.bf16 %v388, %v387
      %v427 = vpack.c.bf16 %v390, %v389
      %v428 = vpack.c.bf16 %v392, %v391
      %v429 = vpack.c.bf16 %v394, %v393
      %v430 = vpack.c.bf16 %v396, %v395
      %v431 = vpack.c.bf16 %v398, %v397
      %v432 = vpack.c.bf16 %v400, %v399
      %v433 = vld [vmem:[%s1] sm:$0xff]
      %v434 = vld [vmem:[%s1 + $0x8] sm:$0xff]
      %v435 = vld [vmem:[%s1 + $0x10] sm:$0xff]
      %v436 = vld [vmem:[%s1 + $0x18] sm:$0xff]
      %v437 = vld [vmem:[%s2] sm:$0x3]
      %v439 = vlaneseq
      %v440 = vshrl.u32 %v439, 7
      %v441 = vsub.s32 0, %v440
      %v442 = vrot.slane %v437, %v441
      %v443 = vlaneseq
      %v444 = vshrl.u32 %v443, 7
      %v445 = vsub.s32 1, %v444
      %v446 = vrot.slane %v437, %v445
      %v453 = vunpack.c.l.b16 %v433
      %v454 = vunpack.c.h.b16 %v433
      %v455 = vunpack.c.l.b16 %v434
      %v456 = vunpack.c.h.b16 %v434
      %v457 = vunpack.c.l.b16 %v435
      %v458 = vunpack.c.h.b16 %v435
      %v459 = vunpack.c.l.b16 %v436
      %v460 = vunpack.c.h.b16 %v436
      %v461 = vpack.c.b16 %v455, %v453
      %v462 = vpack.c.b16 %v456, %v454
      %v463 = vpack.c.b16 %v459, %v457
      %v464 = vpack.c.b16 %v460, %v458
      %vm469 = vcmask 261120
      %v471 = vsel %vm469, %v401, 0
      %v474 = vsel %vm469, %v402, 0
      %v477 = vsel %vm469, %v403, 0
      %v480 = vsel %vm469, %v404, 0
      %v483 = vsel %vm469, %v405, 0
      %v486 = vsel %vm469, %v406, 0
      %v489 = vsel %vm469, %v407, 0
      %v492 = vsel %vm469, %v408, 0
      %v495 = vsel %vm469, %v409, 0
      %v498 = vsel %vm469, %v410, 0
      %v501 = vsel %vm469, %v411, 0
      %v504 = vsel %vm469, %v412, 0
      %v507 = vsel %vm469, %v413, 0
      %v510 = vsel %vm469, %v414, 0
      %v513 = vsel %vm469, %v415, 0
      %v516 = vsel %vm469, %v416, 0
      %v519 = vsel %vm469, %v417, 0
      %v522 = vsel %vm469, %v418, 0
      %v525 = vsel %vm469, %v419, 0
      %v528 = vsel %vm469, %v420, 0
      %v531 = vsel %vm469, %v421, 0
      %v534 = vsel %vm469, %v422, 0
      %v537 = vsel %vm469, %v423, 0
      %v540 = vsel %vm469, %v424, 0
      %v543 = vsel %vm469, %v425, 0
      %v546 = vsel %vm469, %v426, 0
      %v549 = vsel %vm469, %v427, 0
      %v552 = vsel %vm469, %v428, 0
      %v555 = vsel %vm469, %v429, 0
      %v558 = vsel %vm469, %v430, 0
      %v561 = vsel %vm469, %v431, 0
      %v564 = vsel %vm469, %v432, 0
      %566 = vmatprep.subr.bf16.mxu0 %v462
      %567 = vmatpush1.bf16.msra.mxu0 %v461
      %568 = vmatprep.subr.bf16.mxu0 %v464
      %569 = vmatpush1.bf16.msra.mxu0 %v463
      %570 = vmatprep.subr.bf16.mxu0 0
      %571 = vmatpush1.bf16.msra.mxu0 0
      %572 = vmatprep.subr.bf16.mxu0 0
      %573 = vmatpush1.bf16.msra.mxu0 0
      %574 = vmatprep.subr.bf16.mxu0 0
      %575 = vmatpush1.bf16.msra.mxu0 0
      %576 = vmatprep.subr.bf16.mxu0 0
      %577 = vmatpush1.bf16.msra.mxu0 0
      %578 = vmatprep.subr.bf16.mxu0 0
      %579 = vmatpush1.bf16.msra.mxu0 0
      %580 = vmatprep.subr.bf16.mxu0 0
      %581 = vmatpush1.bf16.msra.mxu0 0
      %582 = vmatprep.subr.bf16.mxu0 0
      %583 = vmatpush1.bf16.msra.mxu0 0
      %584 = vmatprep.subr.bf16.mxu0 0
      %585 = vmatpush1.bf16.msra.mxu0 0
      %586 = vmatprep.subr.bf16.mxu0 0
      %587 = vmatpush1.bf16.msra.mxu0 0
      %588 = vmatprep.subr.bf16.mxu0 0
      %589 = vmatpush1.bf16.msra.mxu0 0
      %590 = vmatprep.subr.bf16.mxu0 0
      %591 = vmatpush1.bf16.msra.mxu0 0
      %592 = vmatprep.subr.bf16.mxu0 0
      %593 = vmatpush1.bf16.msra.mxu0 0
      %594 = vmatprep.subr.bf16.mxu0 0
      %595 = vmatpush1.bf16.msra.mxu0 0
      %596 = vmatprep.subr.bf16.mxu0 0
      %597 = vmatpush1.bf16.msra.mxu0 0
      %598 = vmatprep.mubr.bf16.mxu0 0
      %599 = vmatmul.mubr.bf16.gmra.mrb[0].mxu0 %v471
      %v600 = vpop.f32.mrb[0].mxu0
      %v601 = vadd.f32 %v442, %v600
      %v602 = vpop.f32.mrb[0].mxu0
      %v603 = vadd.f32 %v446, %v602
      %v604 = vpop.f32.mrb[0].mxu0
      %v605 = vadd.f32 %v442, %v604
      %v606 = vpop.f32.mrb[0].mxu0
      %v607 = vadd.f32 %v446, %v606
      %608 = vmatprep.mubr.bf16.mxu0 0
      %609 = vmatmul.mubr.bf16.gmra.mrb[0].mxu0 %v474
      %v610 = vpop.f32.mrb[0].mxu0
      %v611 = vadd.f32 %v442, %v610
      %v612 = vpop.f32.mrb[0].mxu0
      %v613 = vadd.f32 %v446, %v612
      %v614 = vpop.f32.mrb[0].mxu0
      %v615 = vadd.f32 %v442, %v614
      %v616 = vpop.f32.mrb[0].mxu0
      %v617 = vadd.f32 %v446, %v616
      %618 = vmatprep.mubr.bf16.mxu0 0
      %619 = vmatmul.mubr.bf16.gmra.mrb[0].mxu0 %v477
      %v620 = vpop.f32.mrb[0].mxu0
      %v621 = vadd.f32 %v442, %v620
      %v622 = vpop.f32.mrb[0].mxu0
      %v623 = vadd.f32 %v446, %v622
      %v624 = vpop.f32.mrb[0].mxu0
      %v625 = vadd.f32 %v442, %v624
      %v626 = vpop.f32.mrb[0].mxu0
      %v627 = vadd.f32 %v446, %v626
      %628 = vmatprep.mubr.bf16.mxu0 0
      %629 = vmatmul.mubr.bf16.gmra.mrb[0].mxu0 %v480
      %v630 = vpop.f32.mrb[0].mxu0
      %v631 = vadd.f32 %v442, %v630
      %v632 = vpop.f32.mrb[0].mxu0
      %v633 = vadd.f32 %v446, %v632
      %v634 = vpop.f32.mrb[0].mxu0
      %v635 = vadd.f32 %v442, %v634
      %v636 = vpop.f32.mrb[0].mxu0
      %v637 = vadd.f32 %v446, %v636
      %638 = vmatprep.mubr.bf16.mxu0 0
      %639 = vmatmul.mubr.bf16.gmra.mrb[0].mxu0 %v483
      %v640 = vpop.f32.mrb[0].mxu0
      %v641 = vadd.f32 %v442, %v640
      %v642 = vpop.f32.mrb[0].mxu0
      %v643 = vadd.f32 %v446, %v642
      %v644 = vpop.f32.mrb[0].mxu0
      %v645 = vadd.f32 %v442, %v644
      %v646 = vpop.f32.mrb[0].mxu0
      %v647 = vadd.f32 %v446, %v646
      %648 = vmatprep.mubr.bf16.mxu0 0
      %649 = vmatmul.mubr.bf16.gmra.mrb[0].mxu0 %v486
      %v650 = vpop.f32.mrb[0].mxu0
      %v651 = vadd.f32 %v442, %v650
      %v652 = vpop.f32.mrb[0].mxu0
      %v653 = vadd.f32 %v446, %v652
      %v654 = vpop.f32.mrb[0].mxu0
      %v655 = vadd.f32 %v442, %v654
      %v656 = vpop.f32.mrb[0].mxu0
      %v657 = vadd.f32 %v446, %v656
      %658 = vmatprep.mubr.bf16.mxu0 0
      %659 = vmatmul.mubr.bf16.gmra.mrb[0].mxu0 %v489
      %v660 = vpop.f32.mrb[0].mxu0
      %v661 = vadd.f32 %v442, %v660
      %v662 = vpop.f32.mrb[0].mxu0
      %v663 = vadd.f32 %v446, %v662
      %v664 = vpop.f32.mrb[0].mxu0
      %v665 = vadd.f32 %v442, %v664
      %v666 = vpop.f32.mrb[0].mxu0
      %v667 = vadd.f32 %v446, %v666
      %668 = vmatprep.mubr.bf16.mxu0 0
      %669 = vmatmul.mubr.bf16.gmra.mrb[0].mxu0 %v492
      %v670 = vpop.f32.mrb[0].mxu0
      %v671 = vadd.f32 %v442, %v670
      %v672 = vpop.f32.mrb[0].mxu0
      %v673 = vadd.f32 %v446, %v672
      %v674 = vpop.f32.mrb[0].mxu0
      %v675 = vadd.f32 %v442, %v674
      %v676 = vpop.f32.mrb[0].mxu0
      %v677 = vadd.f32 %v446, %v676
      %678 = vmatprep.mubr.bf16.mxu0 0
      %679 = vmatmul.mubr.bf16.gmra.mrb[0].mxu0 %v495
      %v680 = vpop.f32.mrb[0].mxu0
      %v681 = vadd.f32 %v442, %v680
      %v682 = vpop.f32.mrb[0].mxu0
      %v683 = vadd.f32 %v446, %v682
      %v684 = vpop.f32.mrb[0].mxu0
      %v685 = vadd.f32 %v442, %v684
      %v686 = vpop.f32.mrb[0].mxu0
      %v687 = vadd.f32 %v446, %v686
      %688 = vmatprep.mubr.bf16.mxu0 0
      %689 = vmatmul.mubr.bf16.gmra.mrb[0].mxu0 %v498
      %v690 = vpop.f32.mrb[0].mxu0
      %v691 = vadd.f32 %v442, %v690
      %v692 = vpop.f32.mrb[0].mxu0
      %v693 = vadd.f32 %v446, %v692
      %v694 = vpop.f32.mrb[0].mxu0
      %v695 = vadd.f32 %v442, %v694
      %v696 = vpop.f32.mrb[0].mxu0
      %v697 = vadd.f32 %v446, %v696
      %698 = vmatprep.mubr.bf16.mxu0 0
      %699 = vmatmul.mubr.bf16.gmra.mrb[0].mxu0 %v501
      %v700 = vpop.f32.mrb[0].mxu0
      %v701 = vadd.f32 %v442, %v700
      %v702 = vpop.f32.mrb[0].mxu0
      %v703 = vadd.f32 %v446, %v702
      %v704 = vpop.f32.mrb[0].mxu0
      %v705 = vadd.f32 %v442, %v704
      %v706 = vpop.f32.mrb[0].mxu0
      %v707 = vadd.f32 %v446, %v706
      %708 = vmatprep.mubr.bf16.mxu0 0
      %709 = vmatmul.mubr.bf16.gmra.mrb[0].mxu0 %v504
      %v710 = vpop.f32.mrb[0].mxu0
      %v711 = vadd.f32 %v442, %v710
      %v712 = vpop.f32.mrb[0].mxu0
      %v713 = vadd.f32 %v446, %v712
      %v714 = vpop.f32.mrb[0].mxu0
      %v715 = vadd.f32 %v442, %v714
      %v716 = vpop.f32.mrb[0].mxu0
      %v717 = vadd.f32 %v446, %v716
      %718 = vmatprep.mubr.bf16.mxu0 0
      %719 = vmatmul.mubr.bf16.gmra.mrb[0].mxu0 %v507
      %v720 = vpop.f32.mrb[0].mxu0
      %v721 = vadd.f32 %v442, %v720
      %v722 = vpop.f32.mrb[0].mxu0
      %v723 = vadd.f32 %v446, %v722
      %v724 = vpop.f32.mrb[0].mxu0
      %v725 = vadd.f32 %v442, %v724
      %v726 = vpop.f32.mrb[0].mxu0
      %v727 = vadd.f32 %v446, %v726
      %728 = vmatprep.mubr.bf16.mxu0 0
      %729 = vmatmul.mubr.bf16.gmra.mrb[0].mxu0 %v510
      %v730 = vpop.f32.mrb[0].mxu0
      %v731 = vadd.f32 %v442, %v730
      %v732 = vpop.f32.mrb[0].mxu0
      %v733 = vadd.f32 %v446, %v732
      %v734 = vpop.f32.mrb[0].mxu0
      %v735 = vadd.f32 %v442, %v734
      %v736 = vpop.f32.mrb[0].mxu0
      %v737 = vadd.f32 %v446, %v736
      %738 = vmatprep.mubr.bf16.mxu0 0
      %739 = vmatmul.mubr.bf16.gmra.mrb[0].mxu0 %v513
      %v740 = vpop.f32.mrb[0].mxu0
      %v741 = vadd.f32 %v442, %v740
      %v742 = vpop.f32.mrb[0].mxu0
      %v743 = vadd.f32 %v446, %v742
      %v744 = vpop.f32.mrb[0].mxu0
      %v745 = vadd.f32 %v442, %v744
      %v746 = vpop.f32.mrb[0].mxu0
      %v747 = vadd.f32 %v446, %v746
      %748 = vmatprep.mubr.bf16.mxu0 0
      %749 = vmatmul.mubr.bf16.gmra.mrb[0].mxu0 %v516
      %v750 = vpop.f32.mrb[0].mxu0
      %v751 = vadd.f32 %v442, %v750
      %v752 = vpop.f32.mrb[0].mxu0
      %v753 = vadd.f32 %v446, %v752
      %v754 = vpop.f32.mrb[0].mxu0
      %v755 = vadd.f32 %v442, %v754
      %v756 = vpop.f32.mrb[0].mxu0
      %v757 = vadd.f32 %v446, %v756
      %758 = vmatprep.mubr.bf16.mxu0 0
      %759 = vmatmul.mubr.bf16.gmra.mrb[0].mxu0 %v519
      %v760 = vpop.f32.mrb[0].mxu0
      %v761 = vadd.f32 %v442, %v760
      %v762 = vpop.f32.mrb[0].mxu0
      %v763 = vadd.f32 %v446, %v762
      %v764 = vpop.f32.mrb[0].mxu0
      %v765 = vadd.f32 %v442, %v764
      %v766 = vpop.f32.mrb[0].mxu0
      %v767 = vadd.f32 %v446, %v766
      %768 = vmatprep.mubr.bf16.mxu0 0
      %769 = vmatmul.mubr.bf16.gmra.mrb[0].mxu0 %v522
      %v770 = vpop.f32.mrb[0].mxu0
      %v771 = vadd.f32 %v442, %v770
      %v772 = vpop.f32.mrb[0].mxu0
      %v773 = vadd.f32 %v446, %v772
      %v774 = vpop.f32.mrb[0].mxu0
      %v775 = vadd.f32 %v442, %v774
      %v776 = vpop.f32.mrb[0].mxu0
      %v777 = vadd.f32 %v446, %v776
      %778 = vmatprep.mubr.bf16.mxu0 0
      %779 = vmatmul.mubr.bf16.gmra.mrb[0].mxu0 %v525
      %v780 = vpop.f32.mrb[0].mxu0
      %v781 = vadd.f32 %v442, %v780
      %v782 = vpop.f32.mrb[0].mxu0
      %v783 = vadd.f32 %v446, %v782
      %v784 = vpop.f32.mrb[0].mxu0
      %v785 = vadd.f32 %v442, %v784
      %v786 = vpop.f32.mrb[0].mxu0
      %v787 = vadd.f32 %v446, %v786
      %788 = vmatprep.mubr.bf16.mxu0 0
      %789 = vmatmul.mubr.bf16.gmra.mrb[0].mxu0 %v528
      %v790 = vpop.f32.mrb[0].mxu0
      %v791 = vadd.f32 %v442, %v790
      %v792 = vpop.f32.mrb[0].mxu0
      %v793 = vadd.f32 %v446, %v792
      %v794 = vpop.f32.mrb[0].mxu0
      %v795 = vadd.f32 %v442, %v794
      %v796 = vpop.f32.mrb[0].mxu0
      %v797 = vadd.f32 %v446, %v796
      %798 = vmatprep.mubr.bf16.mxu0 0
      %799 = vmatmul.mubr.bf16.gmra.mrb[0].mxu0 %v531
      %v800 = vpop.f32.mrb[0].mxu0
      %v801 = vadd.f32 %v442, %v800
      %v802 = vpop.f32.mrb[0].mxu0
      %v803 = vadd.f32 %v446, %v802
      %v804 = vpop.f32.mrb[0].mxu0
      %v805 = vadd.f32 %v442, %v804
      %v806 = vpop.f32.mrb[0].mxu0
      %v807 = vadd.f32 %v446, %v806
      %808 = vmatprep.mubr.bf16.mxu0 0
      %809 = vmatmul.mubr.bf16.gmra.mrb[0].mxu0 %v534
      %v810 = vpop.f32.mrb[0].mxu0
      %v811 = vadd.f32 %v442, %v810
      %v812 = vpop.f32.mrb[0].mxu0
      %v813 = vadd.f32 %v446, %v812
      %v814 = vpop.f32.mrb[0].mxu0
      %v815 = vadd.f32 %v442, %v814
      %v816 = vpop.f32.mrb[0].mxu0
      %v817 = vadd.f32 %v446, %v816
      %818 = vmatprep.mubr.bf16.mxu0 0
      %819 = vmatmul.mubr.bf16.gmra.mrb[0].mxu0 %v537
      %v820 = vpop.f32.mrb[0].mxu0
      %v821 = vadd.f32 %v442, %v820
      %v822 = vpop.f32.mrb[0].mxu0
      %v823 = vadd.f32 %v446, %v822
      %v824 = vpop.f32.mrb[0].mxu0
      %v825 = vadd.f32 %v442, %v824
      %v826 = vpop.f32.mrb[0].mxu0
      %v827 = vadd.f32 %v446, %v826
      %828 = vmatprep.mubr.bf16.mxu0 0
      %829 = vmatmul.mubr.bf16.gmra.mrb[0].mxu0 %v540
      %v830 = vpop.f32.mrb[0].mxu0
      %v831 = vadd.f32 %v442, %v830
      %v832 = vpop.f32.mrb[0].mxu0
      %v833 = vadd.f32 %v446, %v832
      %v834 = vpop.f32.mrb[0].mxu0
      %v835 = vadd.f32 %v442, %v834
      %v836 = vpop.f32.mrb[0].mxu0
      %v837 = vadd.f32 %v446, %v836
      %838 = vmatprep.mubr.bf16.mxu0 0
      %839 = vmatmul.mubr.bf16.gmra.mrb[0].mxu0 %v543
      %v840 = vpop.f32.mrb[0].mxu0
      %v841 = vadd.f32 %v442, %v840
      %v842 = vpop.f32.mrb[0].mxu0
      %v843 = vadd.f32 %v446, %v842
      %v844 = vpop.f32.mrb[0].mxu0
      %v845 = vadd.f32 %v442, %v844
      %v846 = vpop.f32.mrb[0].mxu0
      %v847 = vadd.f32 %v446, %v846
      %848 = vmatprep.mubr.bf16.mxu0 0
      %849 = vmatmul.mubr.bf16.gmra.mrb[0].mxu0 %v546
      %v850 = vpop.f32.mrb[0].mxu0
      %v851 = vadd.f32 %v442, %v850
      %v852 = vpop.f32.mrb[0].mxu0
      %v853 = vadd.f32 %v446, %v852
      %v854 = vpop.f32.mrb[0].mxu0
      %v855 = vadd.f32 %v442, %v854
      %v856 = vpop.f32.mrb[0].mxu0
      %v857 = vadd.f32 %v446, %v856
      %858 = vmatprep.mubr.bf16.mxu0 0
      %859 = vmatmul.mubr.bf16.gmra.mrb[0].mxu0 %v549
      %v860 = vpop.f32.mrb[0].mxu0
      %v861 = vadd.f32 %v442, %v860
      %v862 = vpop.f32.mrb[0].mxu0
      %v863 = vadd.f32 %v446, %v862
      %v864 = vpop.f32.mrb[0].mxu0
      %v865 = vadd.f32 %v442, %v864
      %v866 = vpop.f32.mrb[0].mxu0
      %v867 = vadd.f32 %v446, %v866
      %868 = vmatprep.mubr.bf16.mxu0 0
      %869 = vmatmul.mubr.bf16.gmra.mrb[0].mxu0 %v552
      %v870 = vpop.f32.mrb[0].mxu0
      %v871 = vadd.f32 %v442, %v870
      %v872 = vpop.f32.mrb[0].mxu0
      %v873 = vadd.f32 %v446, %v872
      %v874 = vpop.f32.mrb[0].mxu0
      %v875 = vadd.f32 %v442, %v874
      %v876 = vpop.f32.mrb[0].mxu0
      %v877 = vadd.f32 %v446, %v876
      %878 = vmatprep.mubr.bf16.mxu0 0
      %879 = vmatmul.mubr.bf16.gmra.mrb[0].mxu0 %v555
      %v880 = vpop.f32.mrb[0].mxu0
      %v881 = vadd.f32 %v442, %v880
      %v882 = vpop.f32.mrb[0].mxu0
      %v883 = vadd.f32 %v446, %v882
      %v884 = vpop.f32.mrb[0].mxu0
      %v885 = vadd.f32 %v442, %v884
      %v886 = vpop.f32.mrb[0].mxu0
      %v887 = vadd.f32 %v446, %v886
      %888 = vmatprep.mubr.bf16.mxu0 0
      %889 = vmatmul.mubr.bf16.gmra.mrb[0].mxu0 %v558
      %v890 = vpop.f32.mrb[0].mxu0
      %v891 = vadd.f32 %v442, %v890
      %v892 = vpop.f32.mrb[0].mxu0
      %v893 = vadd.f32 %v446, %v892
      %v894 = vpop.f32.mrb[0].mxu0
      %v895 = vadd.f32 %v442, %v894
      %v896 = vpop.f32.mrb[0].mxu0
      %v897 = vadd.f32 %v446, %v896
      %898 = vmatprep.mubr.bf16.mxu0 0
      %899 = vmatmul.mubr.bf16.gmra.mrb[0].mxu0 %v561
      %v900 = vpop.f32.mrb[0].mxu0
      %v901 = vadd.f32 %v442, %v900
      %v902 = vpop.f32.mrb[0].mxu0
      %v903 = vadd.f32 %v446, %v902
      %v904 = vpop.f32.mrb[0].mxu0
      %v905 = vadd.f32 %v442, %v904
      %v906 = vpop.f32.mrb[0].mxu0
      %v907 = vadd.f32 %v446, %v906
      %908 = vmatprep.mubr.bf16.mxu0 0
      %909 = vmatmul.mubr.bf16.gmra.mrb[0].mxu0 %v564
      %v910 = vpop.f32.mrb[0].mxu0
      %v911 = vadd.f32 %v442, %v910
      %v912 = vpop.f32.mrb[0].mxu0
      %v913 = vadd.f32 %v446, %v912
      %v914 = vpop.f32.mrb[0].mxu0
      %v915 = vadd.f32 %v442, %v914
      %v916 = vpop.f32.mrb[0].mxu0
      %v917 = vadd.f32 %v446, %v916
      %918 = vdwg.mxu0
      %v919 = vmax.f32 %v601, 0.0
      %v920 = vmax.f32 %v603, 0.0
      %v921 = vmax.f32 %v605, 0.0
      %v922 = vmax.f32 %v607, 0.0
      %v923 = vmax.f32 %v611, 0.0
      %v924 = vmax.f32 %v613, 0.0
      %v925 = vmax.f32 %v615, 0.0
      %v926 = vmax.f32 %v617, 0.0
      %v927 = vmax.f32 %v621, 0.0
      %v928 = vmax.f32 %v623, 0.0
      %v929 = vmax.f32 %v625, 0.0
      %v930 = vmax.f32 %v627, 0.0
      %v931 = vmax.f32 %v631, 0.0
      %v932 = vmax.f32 %v633, 0.0
      %v933 = vmax.f32 %v635, 0.0
      %v934 = vmax.f32 %v637, 0.0
      %v935 = vmax.f32 %v641, 0.0
      %v936 = vmax.f32 %v643, 0.0
      %v937 = vmax.f32 %v645, 0.0
      %v938 = vmax.f32 %v647, 0.0
      %v939 = vmax.f32 %v651, 0.0
      %v940 = vmax.f32 %v653, 0.0
      %v941 = vmax.f32 %v655, 0.0
      %v942 = vmax.f32 %v657, 0.0
      %v943 = vmax.f32 %v661, 0.0
      %v944 = vmax.f32 %v663, 0.0
      %v945 = vmax.f32 %v665, 0.0
      %v946 = vmax.f32 %v667, 0.0
      %v947 = vmax.f32 %v671, 0.0
      %v948 = vmax.f32 %v673, 0.0
      %v949 = vmax.f32 %v675, 0.0
      %v950 = vmax.f32 %v677, 0.0
      %v951 = vmax.f32 %v681, 0.0
      %v952 = vmax.f32 %v683, 0.0
      %v953 = vmax.f32 %v685, 0.0
      %v954 = vmax.f32 %v687, 0.0
      %v955 = vmax.f32 %v691, 0.0
      %v956 = vmax.f32 %v693, 0.0
      %v957 = vmax.f32 %v695, 0.0
      %v958 = vmax.f32 %v697, 0.0
      %v959 = vmax.f32 %v701, 0.0
      %v960 = vmax.f32 %v703, 0.0
      %v961 = vmax.f32 %v705, 0.0
      %v962 = vmax.f32 %v707, 0.0
      %v963 = vmax.f32 %v711, 0.0
      %v964 = vmax.f32 %v713, 0.0
      %v965 = vmax.f32 %v715, 0.0
      %v966 = vmax.f32 %v717, 0.0
      %v967 = vmax.f32 %v721, 0.0
      %v968 = vmax.f32 %v723, 0.0
      %v969 = vmax.f32 %v725, 0.0
      %v970 = vmax.f32 %v727, 0.0
      %v971 = vmax.f32 %v731, 0.0
      %v972 = vmax.f32 %v733, 0.0
      %v973 = vmax.f32 %v735, 0.0
      %v974 = vmax.f32 %v737, 0.0
      %v975 = vmax.f32 %v741, 0.0
      %v976 = vmax.f32 %v743, 0.0
      %v977 = vmax.f32 %v745, 0.0
      %v978 = vmax.f32 %v747, 0.0
      %v979 = vmax.f32 %v751, 0.0
      %v980 = vmax.f32 %v753, 0.0
      %v981 = vmax.f32 %v755, 0.0
      %v982 = vmax.f32 %v757, 0.0
      %v983 = vmax.f32 %v761, 0.0
      %v984 = vmax.f32 %v763, 0.0
      %v985 = vmax.f32 %v765, 0.0
      %v986 = vmax.f32 %v767, 0.0
      %v987 = vmax.f32 %v771, 0.0
      %v988 = vmax.f32 %v773, 0.0
      %v989 = vmax.f32 %v775, 0.0
      %v990 = vmax.f32 %v777, 0.0
      %v991 = vmax.f32 %v781, 0.0
      %v992 = vmax.f32 %v783, 0.0
      %v993 = vmax.f32 %v785, 0.0
      %v994 = vmax.f32 %v787, 0.0
      %v995 = vmax.f32 %v791, 0.0
      %v996 = vmax.f32 %v793, 0.0
      %v997 = vmax.f32 %v795, 0.0
      %v998 = vmax.f32 %v797, 0.0
      %v999 = vmax.f32 %v801, 0.0
      %v1000 = vmax.f32 %v803, 0.0
      %v1001 = vmax.f32 %v805, 0.0
      %v1002 = vmax.f32 %v807, 0.0
      %v1003 = vmax.f32 %v811, 0.0
      %v1004 = vmax.f32 %v813, 0.0
      %v1005 = vmax.f32 %v815, 0.0
      %v1006 = vmax.f32 %v817, 0.0
      %v1007 = vmax.f32 %v821, 0.0
      %v1008 = vmax.f32 %v823, 0.0
      %v1009 = vmax.f32 %v825, 0.0
      %v1010 = vmax.f32 %v827, 0.0
      %v1011 = vmax.f32 %v831, 0.0
      %v1012 = vmax.f32 %v833, 0.0
      %v1013 = vmax.f32 %v835, 0.0
      %v1014 = vmax.f32 %v837, 0.0
      %v1015 = vmax.f32 %v841, 0.0
      %v1016 = vmax.f32 %v843, 0.0
      %v1017 = vmax.f32 %v845, 0.0
      %v1018 = vmax.f32 %v847, 0.0
      %v1019 = vmax.f32 %v851, 0.0
      %v1020 = vmax.f32 %v853, 0.0
      %v1021 = vmax.f32 %v855, 0.0
      %v1022 = vmax.f32 %v857, 0.0
      %v1023 = vmax.f32 %v861, 0.0
      %v1024 = vmax.f32 %v863, 0.0
      %v1025 = vmax.f32 %v865, 0.0
      %v1026 = vmax.f32 %v867, 0.0
      %v1027 = vmax.f32 %v871, 0.0
      %v1028 = vmax.f32 %v873, 0.0
      %v1029 = vmax.f32 %v875, 0.0
      %v1030 = vmax.f32 %v877, 0.0
      %v1031 = vmax.f32 %v881, 0.0
      %v1032 = vmax.f32 %v883, 0.0
      %v1033 = vmax.f32 %v885, 0.0
      %v1034 = vmax.f32 %v887, 0.0
      %v1035 = vmax.f32 %v891, 0.0
      %v1036 = vmax.f32 %v893, 0.0
      %v1037 = vmax.f32 %v895, 0.0
      %v1038 = vmax.f32 %v897, 0.0
      %v1039 = vmax.f32 %v901, 0.0
      %v1040 = vmax.f32 %v903, 0.0
      %v1041 = vmax.f32 %v905, 0.0
      %v1042 = vmax.f32 %v907, 0.0
      %v1043 = vmax.f32 %v911, 0.0
      %v1044 = vmax.f32 %v913, 0.0
      %v1045 = vmax.f32 %v915, 0.0
      %v1046 = vmax.f32 %v917, 0.0
      %v1047 = vpack.c.bf16 %v921, %v919
      %v1048 = vpack.c.bf16 %v922, %v920
      %v1049 = vpack.c.bf16 %v925, %v923
      %v1050 = vpack.c.bf16 %v926, %v924
      %v1051 = vpack.c.bf16 %v929, %v927
      %v1052 = vpack.c.bf16 %v930, %v928
      %v1053 = vpack.c.bf16 %v933, %v931
      %v1054 = vpack.c.bf16 %v934, %v932
      %v1055 = vpack.c.bf16 %v937, %v935
      %v1056 = vpack.c.bf16 %v938, %v936
      %v1057 = vpack.c.bf16 %v941, %v939
      %v1058 = vpack.c.bf16 %v942, %v940
      %v1059 = vpack.c.bf16 %v945, %v943
      %v1060 = vpack.c.bf16 %v946, %v944
      %v1061 = vpack.c.bf16 %v949, %v947
      %v1062 = vpack.c.bf16 %v950, %v948
      %v1063 = vpack.c.bf16 %v953, %v951
      %v1064 = vpack.c.bf16 %v954, %v952
      %v1065 = vpack.c.bf16 %v957, %v955
      %v1066 = vpack.c.bf16 %v958, %v956
      %v1067 = vpack.c.bf16 %v961, %v959
      %v1068 = vpack.c.bf16 %v962, %v960
      %v1069 = vpack.c.bf16 %v965, %v963
      %v1070 = vpack.c.bf16 %v966, %v964
      %v1071 = vpack.c.bf16 %v969, %v967
      %v1072 = vpack.c.bf16 %v970, %v968
      %v1073 = vpack.c.bf16 %v973, %v971
      %v1074 = vpack.c.bf16 %v974, %v972
      %v1075 = vpack.c.bf16 %v977, %v975
      %v1076 = vpack.c.bf16 %v978, %v976
      %v1077 = vpack.c.bf16 %v981, %v979
      %v1078 = vpack.c.bf16 %v982, %v980
      %v1079 = vpack.c.bf16 %v985, %v983
      %v1080 = vpack.c.bf16 %v986, %v984
      %v1081 = vpack.c.bf16 %v989, %v987
      %v1082 = vpack.c.bf16 %v990, %v988
      %v1083 = vpack.c.bf16 %v993, %v991
      %v1084 = vpack.c.bf16 %v994, %v992
      %v1085 = vpack.c.bf16 %v997, %v995
      %v1086 = vpack.c.bf16 %v998, %v996
      %v1087 = vpack.c.bf16 %v1001, %v999
      %v1088 = vpack.c.bf16 %v1002, %v1000
      %v1089 = vpack.c.bf16 %v1005, %v1003
      %v1090 = vpack.c.bf16 %v1006, %v1004
      %v1091 = vpack.c.bf16 %v1009, %v1007
      %v1092 = vpack.c.bf16 %v1010, %v1008
      %v1093 = vpack.c.bf16 %v1013, %v1011
      %v1094 = vpack.c.bf16 %v1014, %v1012
      %v1095 = vpack.c.bf16 %v1017, %v1015
      %v1096 = vpack.c.bf16 %v1018, %v1016
      %v1097 = vpack.c.bf16 %v1021, %v1019
      %v1098 = vpack.c.bf16 %v1022, %v1020
      %v1099 = vpack.c.bf16 %v1025, %v1023
      %v1100 = vpack.c.bf16 %v1026, %v1024
      %v1101 = vpack.c.bf16 %v1029, %v1027
      %v1102 = vpack.c.bf16 %v1030, %v1028
      %v1103 = vpack.c.bf16 %v1033, %v1031
      %v1104 = vpack.c.bf16 %v1034, %v1032
      %v1105 = vpack.c.bf16 %v1037, %v1035
      %v1106 = vpack.c.bf16 %v1038, %v1036
      %v1107 = vpack.c.bf16 %v1041, %v1039
      %v1108 = vpack.c.bf16 %v1042, %v1040
      %v1109 = vpack.c.bf16 %v1045, %v1043
      %v1110 = vpack.c.bf16 %v1046, %v1044
      %v1111 = vld [vmem:[%s3] sm:$0xf]
      %v1112 = vld [vmem:[%s3 + $0x4] sm:$0xf]
      %v1113 = vld [vmem:[%s3 + $0x8] sm:$0xf]
      %v1114 = vld [vmem:[%s3 + $0xc] sm:$0xf]
      %v1115 = vld [vmem:[%s3 + $0x10] sm:$0xf]
      %v1116 = vld [vmem:[%s3 + $0x14] sm:$0xf]
      %v1117 = vld [vmem:[%s3 + $0x18] sm:$0xf]
      %v1118 = vld [vmem:[%s3 + $0x1c] sm:$0xf]
      %v1119 = vld [vmem:[%s3 + $0x20] sm:$0xf]
      %v1120 = vld [vmem:[%s3 + $0x24] sm:$0xf]
      %v1121 = vld [vmem:[%s3 + $0x28] sm:$0xf]
      %v1122 = vld [vmem:[%s3 + $0x2c] sm:$0xf]
      %v1123 = vld [vmem:[%s3 + $0x30] sm:$0xf]
      %v1124 = vld [vmem:[%s3 + $0x34] sm:$0xf]
      %v1125 = vld [vmem:[%s3 + $0x38] sm:$0xf]
      %v1126 = vld [vmem:[%s3 + $0x3c] sm:$0xf]
      %v1127 = vld [vmem:[%s3 + $0x40] sm:$0xf]
      %v1128 = vld [vmem:[%s3 + $0x44] sm:$0xf]
      %v1129 = vld [vmem:[%s3 + $0x48] sm:$0xf]
      %v1130 = vld [vmem:[%s3 + $0x4c] sm:$0xf]
      %v1131 = vld [vmem:[%s3 + $0x50] sm:$0xf]
      %v1132 = vld [vmem:[%s3 + $0x54] sm:$0xf]
      %v1133 = vld [vmem:[%s3 + $0x58] sm:$0xf]
      %v1134 = vld [vmem:[%s3 + $0x5c] sm:$0xf]
      %v1135 = vld [vmem:[%s3 + $0x60] sm:$0xf]
      %v1136 = vld [vmem:[%s3 + $0x64] sm:$0xf]
      %v1137 = vld [vmem:[%s3 + $0x68] sm:$0xf]
      %v1138 = vld [vmem:[%s3 + $0x6c] sm:$0xf]
      %v1139 = vld [vmem:[%s3 + $0x70] sm:$0xf]
      %v1140 = vld [vmem:[%s3 + $0x74] sm:$0xf]
      %v1141 = vld [vmem:[%s3 + $0x78] sm:$0xf]
      %v1142 = vld [vmem:[%s3 + $0x7c] sm:$0xf]
      %v1143 = vld [vmem:[%s4] sm:$0x1]
      %v1145 = vlaneseq
      %v1146 = vshrl.u32 %v1145, 7
      %v1147 = vsub.s32 0, %v1146
      %v1148 = vrot.slane %v1143, %v1147
      %v1182 = vunpack.c.l.b16 %v1111
      %v1183 = vunpack.c.l.b16 %v1112
      %v1184 = vunpack.c.l.b16 %v1113
      %v1185 = vunpack.c.l.b16 %v1114
      %v1186 = vunpack.c.l.b16 %v1115
      %v1187 = vunpack.c.l.b16 %v1116
      %v1188 = vunpack.c.l.b16 %v1117
      %v1189 = vunpack.c.l.b16 %v1118
      %v1190 = vunpack.c.l.b16 %v1119
      %v1191 = vunpack.c.l.b16 %v1120
      %v1192 = vunpack.c.l.b16 %v1121
      %v1193 = vunpack.c.l.b16 %v1122
      %v1194 = vunpack.c.l.b16 %v1123
      %v1195 = vunpack.c.l.b16 %v1124
      %v1196 = vunpack.c.l.b16 %v1125
      %v1197 = vunpack.c.l.b16 %v1126
      %v1198 = vunpack.c.l.b16 %v1127
      %v1199 = vunpack.c.l.b16 %v1128
      %v1200 = vunpack.c.l.b16 %v1129
      %v1201 = vunpack.c.l.b16 %v1130
      %v1202 = vunpack.c.l.b16 %v1131
      %v1203 = vunpack.c.l.b16 %v1132
      %v1204 = vunpack.c.l.b16 %v1133
      %v1205 = vunpack.c.l.b16 %v1134
      %v1206 = vunpack.c.l.b16 %v1135
      %v1207 = vunpack.c.l.b16 %v1136
      %v1208 = vunpack.c.l.b16 %v1137
      %v1209 = vunpack.c.l.b16 %v1138
      %v1210 = vunpack.c.l.b16 %v1139
      %v1211 = vunpack.c.l.b16 %v1140
      %v1212 = vunpack.c.l.b16 %v1141
      %v1213 = vunpack.c.l.b16 %v1142
      %v1214 = vpack.c.b16 %v1183, %v1182
      %v1215 = vpack.c.b16 %v1185, %v1184
      %v1216 = vpack.c.b16 %v1187, %v1186
      %v1217 = vpack.c.b16 %v1189, %v1188
      %v1218 = vpack.c.b16 %v1191, %v1190
      %v1219 = vpack.c.b16 %v1193, %v1192
      %v1220 = vpack.c.b16 %v1195, %v1194
      %v1221 = vpack.c.b16 %v1197, %v1196
      %v1222 = vpack.c.b16 %v1199, %v1198
      %v1223 = vpack.c.b16 %v1201, %v1200
      %v1224 = vpack.c.b16 %v1203, %v1202
      %v1225 = vpack.c.b16 %v1205, %v1204
      %v1226 = vpack.c.b16 %v1207, %v1206
      %v1227 = vpack.c.b16 %v1209, %v1208
      %v1228 = vpack.c.b16 %v1211, %v1210
      %v1229 = vpack.c.b16 %v1213, %v1212
      %1246 = vmatprep.subr.bf16.mxu0 0
      %1247 = vmatpush1.bf16.msra.mxu0 %v1214
      %1248 = vmatprep.subr.bf16.mxu0 0
      %1249 = vmatpush1.bf16.msra.mxu0 %v1215
      %1250 = vmatprep.subr.bf16.mxu0 0
      %1251 = vmatpush1.bf16.msra.mxu0 %v1216
      %1252 = vmatprep.subr.bf16.mxu0 0
      %1253 = vmatpush1.bf16.msra.mxu0 %v1217
      %1254 = vmatprep.subr.bf16.mxu0 0
      %1255 = vmatpush1.bf16.msra.mxu0 %v1218
      %1256 = vmatprep.subr.bf16.mxu0 0
      %1257 = vmatpush1.bf16.msra.mxu0 %v1219
      %1258 = vmatprep.subr.bf16.mxu0 0
      %1259 = vmatpush1.bf16.msra.mxu0 %v1220
      %1260 = vmatprep.subr.bf16.mxu0 0
      %1261 = vmatpush1.bf16.msra.mxu0 %v1221
      %1262 = vmatprep.subr.bf16.mxu0 0
      %1263 = vmatpush1.bf16.msra.mxu0 %v1222
      %1264 = vmatprep.subr.bf16.mxu0 0
      %1265 = vmatpush1.bf16.msra.mxu0 %v1223
      %1266 = vmatprep.subr.bf16.mxu0 0
      %1267 = vmatpush1.bf16.msra.mxu0 %v1224
      %1268 = vmatprep.subr.bf16.mxu0 0
      %1269 = vmatpush1.bf16.msra.mxu0 %v1225
      %1270 = vmatprep.subr.bf16.mxu0 0
      %1271 = vmatpush1.bf16.msra.mxu0 %v1226
      %1272 = vmatprep.subr.bf16.mxu0 0
      %1273 = vmatpush1.bf16.msra.mxu0 %v1227
      %1274 = vmatprep.subr.bf16.mxu0 0
      %1275 = vmatpush1.bf16.msra.mxu0 %v1228
      %1276 = vmatprep.subr.bf16.mxu0 0
      %1277 = vmatpush1.bf16.msra.mxu0 %v1229
      %1278 = vmatprep.mubr.bf16.mxu0 %v1048
      %1279 = vmatmul.mubr.bf16.gmra.mrb[0].mxu0 %v1047
      %v1280 = vpop.f32.mrb[0].mxu0
      %v1281 = vadd.f32 %v1148, %v1280
      %v1282 = vpop.f32.mrb[0].mxu0
      %v1283 = vpop.f32.mrb[0].mxu0
      %v1284 = vadd.f32 %v1148, %v1283
      %v1285 = vpop.f32.mrb[0].mxu0
      %1286 = vmatprep.mubr.bf16.mxu0 %v1050
      %1287 = vmatmul.mubr.bf16.gmra.mrb[0].mxu0 %v1049
      %v1288 = vpop.f32.mrb[0].mxu0
      %v1289 = vadd.f32 %v1148, %v1288
      %v1290 = vpop.f32.mrb[0].mxu0
      %v1291 = vpop.f32.mrb[0].mxu0
      %v1292 = vadd.f32 %v1148, %v1291
      %v1293 = vpop.f32.mrb[0].mxu0
      %1294 = vmatprep.mubr.bf16.mxu0 %v1052
      %1295 = vmatmul.mubr.bf16.gmra.mrb[0].mxu0 %v1051
      %v1296 = vpop.f32.mrb[0].mxu0
      %v1297 = vadd.f32 %v1148, %v1296
      %v1298 = vpop.f32.mrb[0].mxu0
      %v1299 = vpop.f32.mrb[0].mxu0
      %v1300 = vadd.f32 %v1148, %v1299
      %v1301 = vpop.f32.mrb[0].mxu0
      %1302 = vmatprep.mubr.bf16.mxu0 %v1054
      %1303 = vmatmul.mubr.bf16.gmra.mrb[0].mxu0 %v1053
      %v1304 = vpop.f32.mrb[0].mxu0
      %v1305 = vadd.f32 %v1148, %v1304
      %v1306 = vpop.f32.mrb[0].mxu0
      %v1307 = vpop.f32.mrb[0].mxu0
      %v1308 = vadd.f32 %v1148, %v1307
      %v1309 = vpop.f32.mrb[0].mxu0
      %1310 = vmatprep.mubr.bf16.mxu0 %v1056
      %1311 = vmatmul.mubr.bf16.gmra.mrb[0].mxu0 %v1055
      %v1312 = vpop.f32.mrb[0].mxu0
      %v1313 = vadd.f32 %v1148, %v1312
      %v1314 = vpop.f32.mrb[0].mxu0
      %v1315 = vpop.f32.mrb[0].mxu0
      %v1316 = vadd.f32 %v1148, %v1315
      %v1317 = vpop.f32.mrb[0].mxu0
      %1318 = vmatprep.mubr.bf16.mxu0 %v1058
      %1319 = vmatmul.mubr.bf16.gmra.mrb[0].mxu0 %v1057
      %v1320 = vpop.f32.mrb[0].mxu0
      %v1321 = vadd.f32 %v1148, %v1320
      %v1322 = vpop.f32.mrb[0].mxu0
      %v1323 = vpop.f32.mrb[0].mxu0
      %v1324 = vadd.f32 %v1148, %v1323
      %v1325 = vpop.f32.mrb[0].mxu0
      %1326 = vmatprep.mubr.bf16.mxu0 %v1060
      %1327 = vmatmul.mubr.bf16.gmra.mrb[0].mxu0 %v1059
      %v1328 = vpop.f32.mrb[0].mxu0
      %v1329 = vadd.f32 %v1148, %v1328
      %v1330 = vpop.f32.mrb[0].mxu0
      %v1331 = vpop.f32.mrb[0].mxu0
      %v1332 = vadd.f32 %v1148, %v1331
      %v1333 = vpop.f32.mrb[0].mxu0
      %1334 = vmatprep.mubr.bf16.mxu0 %v1062
      %1335 = vmatmul.mubr.bf16.gmra.mrb[0].mxu0 %v1061
      %v1336 = vpop.f32.mrb[0].mxu0
      %v1337 = vadd.f32 %v1148, %v1336
      %v1338 = vpop.f32.mrb[0].mxu0
      %v1339 = vpop.f32.mrb[0].mxu0
      %v1340 = vadd.f32 %v1148, %v1339
      %v1341 = vpop.f32.mrb[0].mxu0
      %1342 = vmatprep.mubr.bf16.mxu0 %v1064
      %1343 = vmatmul.mubr.bf16.gmra.mrb[0].mxu0 %v1063
      %v1344 = vpop.f32.mrb[0].mxu0
      %v1345 = vadd.f32 %v1148, %v1344
      %v1346 = vpop.f32.mrb[0].mxu0
      %v1347 = vpop.f32.mrb[0].mxu0
      %v1348 = vadd.f32 %v1148, %v1347
      %v1349 = vpop.f32.mrb[0].mxu0
      %1350 = vmatprep.mubr.bf16.mxu0 %v1066
      %1351 = vmatmul.mubr.bf16.gmra.mrb[0].mxu0 %v1065
      %v1352 = vpop.f32.mrb[0].mxu0
      %v1353 = vadd.f32 %v1148, %v1352
      %v1354 = vpop.f32.mrb[0].mxu0
      %v1355 = vpop.f32.mrb[0].mxu0
      %v1356 = vadd.f32 %v1148, %v1355
      %v1357 = vpop.f32.mrb[0].mxu0
      %1358 = vmatprep.mubr.bf16.mxu0 %v1068
      %1359 = vmatmul.mubr.bf16.gmra.mrb[0].mxu0 %v1067
      %v1360 = vpop.f32.mrb[0].mxu0
      %v1361 = vadd.f32 %v1148, %v1360
      %v1362 = vpop.f32.mrb[0].mxu0
      %v1363 = vpop.f32.mrb[0].mxu0
      %v1364 = vadd.f32 %v1148, %v1363
      %v1365 = vpop.f32.mrb[0].mxu0
      %1366 = vmatprep.mubr.bf16.mxu0 %v1070
      %1367 = vmatmul.mubr.bf16.gmra.mrb[0].mxu0 %v1069
      %v1368 = vpop.f32.mrb[0].mxu0
      %v1369 = vadd.f32 %v1148, %v1368
      %v1370 = vpop.f32.mrb[0].mxu0
      %v1371 = vpop.f32.mrb[0].mxu0
      %v1372 = vadd.f32 %v1148, %v1371
      %v1373 = vpop.f32.mrb[0].mxu0
      %1374 = vmatprep.mubr.bf16.mxu0 %v1072
      %1375 = vmatmul.mubr.bf16.gmra.mrb[0].mxu0 %v1071
      %v1376 = vpop.f32.mrb[0].mxu0
      %v1377 = vadd.f32 %v1148, %v1376
      %v1378 = vpop.f32.mrb[0].mxu0
      %v1379 = vpop.f32.mrb[0].mxu0
      %v1380 = vadd.f32 %v1148, %v1379
      %v1381 = vpop.f32.mrb[0].mxu0
      %1382 = vmatprep.mubr.bf16.mxu0 %v1074
      %1383 = vmatmul.mubr.bf16.gmra.mrb[0].mxu0 %v1073
      %v1384 = vpop.f32.mrb[0].mxu0
      %v1385 = vadd.f32 %v1148, %v1384
      %v1386 = vpop.f32.mrb[0].mxu0
      %v1387 = vpop.f32.mrb[0].mxu0
      %v1388 = vadd.f32 %v1148, %v1387
      %v1389 = vpop.f32.mrb[0].mxu0
      %1390 = vmatprep.mubr.bf16.mxu0 %v1076
      %1391 = vmatmul.mubr.bf16.gmra.mrb[0].mxu0 %v1075
      %v1392 = vpop.f32.mrb[0].mxu0
      %v1393 = vadd.f32 %v1148, %v1392
      %v1394 = vpop.f32.mrb[0].mxu0
      %v1395 = vpop.f32.mrb[0].mxu0
      %v1396 = vadd.f32 %v1148, %v1395
      %v1397 = vpop.f32.mrb[0].mxu0
      %1398 = vmatprep.mubr.bf16.mxu0 %v1078
      %1399 = vmatmul.mubr.bf16.gmra.mrb[0].mxu0 %v1077
      %v1400 = vpop.f32.mrb[0].mxu0
      %v1401 = vadd.f32 %v1148, %v1400
      %v1402 = vpop.f32.mrb[0].mxu0
      %v1403 = vpop.f32.mrb[0].mxu0
      %v1404 = vadd.f32 %v1148, %v1403
      %v1405 = vpop.f32.mrb[0].mxu0
      %1406 = vmatprep.mubr.bf16.mxu0 %v1080
      %1407 = vmatmul.mubr.bf16.gmra.mrb[0].mxu0 %v1079
      %v1408 = vpop.f32.mrb[0].mxu0
      %v1409 = vadd.f32 %v1148, %v1408
      %v1410 = vpop.f32.mrb[0].mxu0
      %v1411 = vpop.f32.mrb[0].mxu0
      %v1412 = vadd.f32 %v1148, %v1411
      %v1413 = vpop.f32.mrb[0].mxu0
      %1414 = vmatprep.mubr.bf16.mxu0 %v1082
      %1415 = vmatmul.mubr.bf16.gmra.mrb[0].mxu0 %v1081
      %v1416 = vpop.f32.mrb[0].mxu0
      %v1417 = vadd.f32 %v1148, %v1416
      %v1418 = vpop.f32.mrb[0].mxu0
      %v1419 = vpop.f32.mrb[0].mxu0
      %v1420 = vadd.f32 %v1148, %v1419
      %v1421 = vpop.f32.mrb[0].mxu0
      %1422 = vmatprep.mubr.bf16.mxu0 %v1084
      %1423 = vmatmul.mubr.bf16.gmra.mrb[0].mxu0 %v1083
      %v1424 = vpop.f32.mrb[0].mxu0
      %v1425 = vadd.f32 %v1148, %v1424
      %v1426 = vpop.f32.mrb[0].mxu0
      %v1427 = vpop.f32.mrb[0].mxu0
      %v1428 = vadd.f32 %v1148, %v1427
      %v1429 = vpop.f32.mrb[0].mxu0
      %1430 = vmatprep.mubr.bf16.mxu0 %v1086
      %1431 = vmatmul.mubr.bf16.gmra.mrb[0].mxu0 %v1085
      %v1432 = vpop.f32.mrb[0].mxu0
      %v1433 = vadd.f32 %v1148, %v1432
      %v1434 = vpop.f32.mrb[0].mxu0
      %v1435 = vpop.f32.mrb[0].mxu0
      %v1436 = vadd.f32 %v1148, %v1435
      %v1437 = vpop.f32.mrb[0].mxu0
      %1438 = vmatprep.mubr.bf16.mxu0 %v1088
      %1439 = vmatmul.mubr.bf16.gmra.mrb[0].mxu0 %v1087
      %v1440 = vpop.f32.mrb[0].mxu0
      %v1441 = vadd.f32 %v1148, %v1440
      %v1442 = vpop.f32.mrb[0].mxu0
      %v1443 = vpop.f32.mrb[0].mxu0
      %v1444 = vadd.f32 %v1148, %v1443
      %v1445 = vpop.f32.mrb[0].mxu0
      %1446 = vmatprep.mubr.bf16.mxu0 %v1090
      %1447 = vmatmul.mubr.bf16.gmra.mrb[0].mxu0 %v1089
      %v1448 = vpop.f32.mrb[0].mxu0
      %v1449 = vadd.f32 %v1148, %v1448
      %v1450 = vpop.f32.mrb[0].mxu0
      %v1451 = vpop.f32.mrb[0].mxu0
      %v1452 = vadd.f32 %v1148, %v1451
      %v1453 = vpop.f32.mrb[0].mxu0
      %1454 = vmatprep.mubr.bf16.mxu0 %v1092
      %1455 = vmatmul.mubr.bf16.gmra.mrb[0].mxu0 %v1091
      %v1456 = vpop.f32.mrb[0].mxu0
      %v1457 = vadd.f32 %v1148, %v1456
      %v1458 = vpop.f32.mrb[0].mxu0
      %v1459 = vpop.f32.mrb[0].mxu0
      %v1460 = vadd.f32 %v1148, %v1459
      %v1461 = vpop.f32.mrb[0].mxu0
      %1462 = vmatprep.mubr.bf16.mxu0 %v1094
      %1463 = vmatmul.mubr.bf16.gmra.mrb[0].mxu0 %v1093
      %v1464 = vpop.f32.mrb[0].mxu0
      %v1465 = vadd.f32 %v1148, %v1464
      %v1466 = vpop.f32.mrb[0].mxu0
      %v1467 = vpop.f32.mrb[0].mxu0
      %v1468 = vadd.f32 %v1148, %v1467
      %v1469 = vpop.f32.mrb[0].mxu0
      %1470 = vmatprep.mubr.bf16.mxu0 %v1096
      %1471 = vmatmul.mubr.bf16.gmra.mrb[0].mxu0 %v1095
      %v1472 = vpop.f32.mrb[0].mxu0
      %v1473 = vadd.f32 %v1148, %v1472
      %v1474 = vpop.f32.mrb[0].mxu0
      %v1475 = vpop.f32.mrb[0].mxu0
      %v1476 = vadd.f32 %v1148, %v1475
      %v1477 = vpop.f32.mrb[0].mxu0
      %1478 = vmatprep.mubr.bf16.mxu0 %v1098
      %1479 = vmatmul.mubr.bf16.gmra.mrb[0].mxu0 %v1097
      %v1480 = vpop.f32.mrb[0].mxu0
      %v1481 = vadd.f32 %v1148, %v1480
      %v1482 = vpop.f32.mrb[0].mxu0
      %v1483 = vpop.f32.mrb[0].mxu0
      %v1484 = vadd.f32 %v1148, %v1483
      %v1485 = vpop.f32.mrb[0].mxu0
      %1486 = vmatprep.mubr.bf16.mxu0 %v1100
      %1487 = vmatmul.mubr.bf16.gmra.mrb[0].mxu0 %v1099
      %v1488 = vpop.f32.mrb[0].mxu0
      %v1489 = vadd.f32 %v1148, %v1488
      %v1490 = vpop.f32.mrb[0].mxu0
      %v1491 = vpop.f32.mrb[0].mxu0
      %v1492 = vadd.f32 %v1148, %v1491
      %v1493 = vpop.f32.mrb[0].mxu0
      %1494 = vmatprep.mubr.bf16.mxu0 %v1102
      %1495 = vmatmul.mubr.bf16.gmra.mrb[0].mxu0 %v1101
      %v1496 = vpop.f32.mrb[0].mxu0
      %v1497 = vadd.f32 %v1148, %v1496
      %v1498 = vpop.f32.mrb[0].mxu0
      %v1499 = vpop.f32.mrb[0].mxu0
      %v1500 = vadd.f32 %v1148, %v1499
      %v1501 = vpop.f32.mrb[0].mxu0
      %1502 = vmatprep.mubr.bf16.mxu0 %v1104
      %1503 = vmatmul.mubr.bf16.gmra.mrb[0].mxu0 %v1103
      %v1504 = vpop.f32.mrb[0].mxu0
      %v1505 = vadd.f32 %v1148, %v1504
      %v1506 = vpop.f32.mrb[0].mxu0
      %v1507 = vpop.f32.mrb[0].mxu0
      %v1508 = vadd.f32 %v1148, %v1507
      %v1509 = vpop.f32.mrb[0].mxu0
      %1510 = vmatprep.mubr.bf16.mxu0 %v1106
      %1511 = vmatmul.mubr.bf16.gmra.mrb[0].mxu0 %v1105
      %v1512 = vpop.f32.mrb[0].mxu0
      %v1513 = vadd.f32 %v1148, %v1512
      %v1514 = vpop.f32.mrb[0].mxu0
      %v1515 = vpop.f32.mrb[0].mxu0
      %v1516 = vadd.f32 %v1148, %v1515
      %v1517 = vpop.f32.mrb[0].mxu0
      %1518 = vmatprep.mubr.bf16.mxu0 %v1108
      %1519 = vmatmul.mubr.bf16.gmra.mrb[0].mxu0 %v1107
      %v1520 = vpop.f32.mrb[0].mxu0
      %v1521 = vadd.f32 %v1148, %v1520
      %v1522 = vpop.f32.mrb[0].mxu0
      %v1523 = vpop.f32.mrb[0].mxu0
      %v1524 = vadd.f32 %v1148, %v1523
      %v1525 = vpop.f32.mrb[0].mxu0
      %1526 = vmatprep.mubr.bf16.mxu0 %v1110
      %1527 = vmatmul.mubr.bf16.gmra.mrb[0].mxu0 %v1109
      %v1528 = vpop.f32.mrb[0].mxu0
      %v1529 = vadd.f32 %v1148, %v1528
      %v1530 = vpop.f32.mrb[0].mxu0
      %v1531 = vpop.f32.mrb[0].mxu0
      %v1532 = vadd.f32 %v1148, %v1531
      %v1533 = vpop.f32.mrb[0].mxu0
      %1534 = vdwg.mxu0
      %v1535 = vpack.c.bf16 %v1284, %v1281
      %v1536 = vpack.c.bf16 %v1292, %v1289
      %v1537 = vpack.c.bf16 %v1300, %v1297
      %v1538 = vpack.c.bf16 %v1308, %v1305
      %v1539 = vpack.c.bf16 %v1316, %v1313
      %v1540 = vpack.c.bf16 %v1324, %v1321
      %v1541 = vpack.c.bf16 %v1332, %v1329
      %v1542 = vpack.c.bf16 %v1340, %v1337
      %v1543 = vpack.c.bf16 %v1348, %v1345
      %v1544 = vpack.c.bf16 %v1356, %v1353
      %v1545 = vpack.c.bf16 %v1364, %v1361
      %v1546 = vpack.c.bf16 %v1372, %v1369
      %v1547 = vpack.c.bf16 %v1380, %v1377
      %v1548 = vpack.c.bf16 %v1388, %v1385
      %v1549 = vpack.c.bf16 %v1396, %v1393
      %v1550 = vpack.c.bf16 %v1404, %v1401
      %v1551 = vpack.c.bf16 %v1412, %v1409
      %v1552 = vpack.c.bf16 %v1420, %v1417
      %v1553 = vpack.c.bf16 %v1428, %v1425
      %v1554 = vpack.c.bf16 %v1436, %v1433
      %v1555 = vpack.c.bf16 %v1444, %v1441
      %v1556 = vpack.c.bf16 %v1452, %v1449
      %v1557 = vpack.c.bf16 %v1460, %v1457
      %v1558 = vpack.c.bf16 %v1468, %v1465
      %v1559 = vpack.c.bf16 %v1476, %v1473
      %v1560 = vpack.c.bf16 %v1484, %v1481
      %v1561 = vpack.c.bf16 %v1492, %v1489
      %v1562 = vpack.c.bf16 %v1500, %v1497
      %v1563 = vpack.c.bf16 %v1508, %v1505
      %v1564 = vpack.c.bf16 %v1516, %v1513
      %v1565 = vpack.c.bf16 %v1524, %v1521
      %v1566 = vpack.c.bf16 %v1532, %v1529
      %v1567 = vld [vmem:[%s5] sm:$0xff]
      %v1568 = vld [vmem:[%s5 + $0x8] sm:$0xff]
      %v1569 = vld [vmem:[%s5 + $0x10] sm:$0xff]
      %v1570 = vld [vmem:[%s5 + $0x18] sm:$0xff]
      %v1571 = vld [vmem:[%s5 + $0x20] sm:$0xff]
      %v1572 = vld [vmem:[%s5 + $0x28] sm:$0xff]
      %v1573 = vld [vmem:[%s5 + $0x30] sm:$0xff]
      %v1574 = vld [vmem:[%s5 + $0x38] sm:$0xff]
      %v1575 = vld [vmem:[%s5 + $0x40] sm:$0xff]
      %v1576 = vld [vmem:[%s5 + $0x48] sm:$0xff]
      %v1577 = vld [vmem:[%s5 + $0x50] sm:$0xff]
      %v1578 = vld [vmem:[%s5 + $0x58] sm:$0xff]
      %v1579 = vld [vmem:[%s5 + $0x60] sm:$0xff]
      %v1580 = vld [vmem:[%s5 + $0x68] sm:$0xff]
      %v1581 = vld [vmem:[%s5 + $0x70] sm:$0xff]
      %v1582 = vld [vmem:[%s5 + $0x78] sm:$0xff]
      %v1583 = vld [vmem:[%s6] sm:$0x3]
      %v1585 = vlaneseq
      %v1586 = vshrl.u32 %v1585, 7
      %v1587 = vsub.s32 0, %v1586
      %v1588 = vrot.slane %v1583, %v1587
      %v1589 = vlaneseq
      %v1590 = vshrl.u32 %v1589, 7
      %v1591 = vsub.s32 1, %v1590
      %v1592 = vrot.slane %v1583, %v1591
      %v1611 = vunpack.c.l.b16 %v1567
      %v1612 = vunpack.c.h.b16 %v1567
      %v1613 = vunpack.c.l.b16 %v1568
      %v1614 = vunpack.c.h.b16 %v1568
      %v1615 = vunpack.c.l.b16 %v1569
      %v1616 = vunpack.c.h.b16 %v1569
      %v1617 = vunpack.c.l.b16 %v1570
      %v1618 = vunpack.c.h.b16 %v1570
      %v1619 = vunpack.c.l.b16 %v1571
      %v1620 = vunpack.c.h.b16 %v1571
      %v1621 = vunpack.c.l.b16 %v1572
      %v1622 = vunpack.c.h.b16 %v1572
      %v1623 = vunpack.c.l.b16 %v1573
      %v1624 = vunpack.c.h.b16 %v1573
      %v1625 = vunpack.c.l.b16 %v1574
      %v1626 = vunpack.c.h.b16 %v1574
      %v1627 = vunpack.c.l.b16 %v1575
      %v1628 = vunpack.c.h.b16 %v1575
      %v1629 = vunpack.c.l.b16 %v1576
      %v1630 = vunpack.c.h.b16 %v1576
      %v1631 = vunpack.c.l.b16 %v1577
      %v1632 = vunpack.c.h.b16 %v1577
      %v1633 = vunpack.c.l.b16 %v1578
      %v1634 = vunpack.c.h.b16 %v1578
      %v1635 = vunpack.c.l.b16 %v1579
      %v1636 = vunpack.c.h.b16 %v1579
      %v1637 = vunpack.c.l.b16 %v1580
      %v1638 = vunpack.c.h.b16 %v1580
      %v1639 = vunpack.c.l.b16 %v1581
      %v1640 = vunpack.c.h.b16 %v1581
      %v1641 = vunpack.c.l.b16 %v1582
      %v1642 = vunpack.c.h.b16 %v1582
      %v1643 = vpack.c.b16 %v1613, %v1611
      %v1644 = vpack.c.b16 %v1614, %v1612
      %v1645 = vpack.c.b16 %v1617, %v1615
      %v1646 = vpack.c.b16 %v1618, %v1616
      %v1647 = vpack.c.b16 %v1621, %v1619
      %v1648 = vpack.c.b16 %v1622, %v1620
      %v1649 = vpack.c.b16 %v1625, %v1623
      %v1650 = vpack.c.b16 %v1626, %v1624
      %v1651 = vpack.c.b16 %v1629, %v1627
      %v1652 = vpack.c.b16 %v1630, %v1628
      %v1653 = vpack.c.b16 %v1633, %v1631
      %v1654 = vpack.c.b16 %v1634, %v1632
      %v1655 = vpack.c.b16 %v1637, %v1635
      %v1656 = vpack.c.b16 %v1638, %v1636
      %v1657 = vpack.c.b16 %v1641, %v1639
      %v1658 = vpack.c.b16 %v1642, %v1640
      %1675 = vmatprep.subr.bf16.mxu0 %v1644
      %1676 = vmatpush1.bf16.msra.mxu0 %v1643
      %1677 = vmatprep.subr.bf16.mxu0 %v1646
      %1678 = vmatpush1.bf16.msra.mxu0 %v1645
      %1679 = vmatprep.subr.bf16.mxu0 %v1648
      %1680 = vmatpush1.bf16.msra.mxu0 %v1647
      %1681 = vmatprep.subr.bf16.mxu0 %v1650
      %1682 = vmatpush1.bf16.msra.mxu0 %v1649
      %1683 = vmatprep.subr.bf16.mxu0 %v1652
      %1684 = vmatpush1.bf16.msra.mxu0 %v1651
      %1685 = vmatprep.subr.bf16.mxu0 %v1654
      %1686 = vmatpush1.bf16.msra.mxu0 %v1653
      %1687 = vmatprep.subr.bf16.mxu0 %v1656
      %1688 = vmatpush1.bf16.msra.mxu0 %v1655
      %1689 = vmatprep.subr.bf16.mxu0 %v1658
      %1690 = vmatpush1.bf16.msra.mxu0 %v1657
      %1691 = vmatprep.subr.bf16.mxu0 0
      %1692 = vmatpush1.bf16.msra.mxu0 0
      %1693 = vmatprep.subr.bf16.mxu0 0
      %1694 = vmatpush1.bf16.msra.mxu0 0
      %1695 = vmatprep.subr.bf16.mxu0 0
      %1696 = vmatpush1.bf16.msra.mxu0 0
      %1697 = vmatprep.subr.bf16.mxu0 0
      %1698 = vmatpush1.bf16.msra.mxu0 0
      %1699 = vmatprep.subr.bf16.mxu0 0
      %1700 = vmatpush1.bf16.msra.mxu0 0
      %1701 = vmatprep.subr.bf16.mxu0 0
      %1702 = vmatpush1.bf16.msra.mxu0 0
      %1703 = vmatprep.subr.bf16.mxu0 0
      %1704 = vmatpush1.bf16.msra.mxu0 0
      %1705 = vmatprep.subr.bf16.mxu0 0
      %1706 = vmatpush1.bf16.msra.mxu0 0
      %1707 = vmatprep.mubr.bf16.mxu0 0
      %1708 = vmatmul.mubr.bf16.gmra.mrb[0].mxu0 %v1535
      %v1709 = vpop.f32.mrb[0].mxu0
      %v1710 = vadd.f32 %v1588, %v1709
      %v1711 = vpop.f32.mrb[0].mxu0
      %v1712 = vadd.f32 %v1592, %v1711
      %v1713 = vpop.f32.mrb[0].mxu0
      %v1714 = vadd.f32 %v1588, %v1713
      %v1715 = vpop.f32.mrb[0].mxu0
      %v1716 = vadd.f32 %v1592, %v1715
      %1717 = vmatprep.mubr.bf16.mxu0 0
      %1718 = vmatmul.mubr.bf16.gmra.mrb[0].mxu0 %v1536
      %v1719 = vpop.f32.mrb[0].mxu0
      %v1720 = vadd.f32 %v1588, %v1719
      %v1721 = vpop.f32.mrb[0].mxu0
      %v1722 = vadd.f32 %v1592, %v1721
      %v1723 = vpop.f32.mrb[0].mxu0
      %v1724 = vadd.f32 %v1588, %v1723
      %v1725 = vpop.f32.mrb[0].mxu0
      %v1726 = vadd.f32 %v1592, %v1725
      %1727 = vmatprep.mubr.bf16.mxu0 0
      %1728 = vmatmul.mubr.bf16.gmra.mrb[0].mxu0 %v1537
      %v1729 = vpop.f32.mrb[0].mxu0
      %v1730 = vadd.f32 %v1588, %v1729
      %v1731 = vpop.f32.mrb[0].mxu0
      %v1732 = vadd.f32 %v1592, %v1731
      %v1733 = vpop.f32.mrb[0].mxu0
      %v1734 = vadd.f32 %v1588, %v1733
      %v1735 = vpop.f32.mrb[0].mxu0
      %v1736 = vadd.f32 %v1592, %v1735
      %1737 = vmatprep.mubr.bf16.mxu0 0
      %1738 = vmatmul.mubr.bf16.gmra.mrb[0].mxu0 %v1538
      %v1739 = vpop.f32.mrb[0].mxu0
      %v1740 = vadd.f32 %v1588, %v1739
      %v1741 = vpop.f32.mrb[0].mxu0
      %v1742 = vadd.f32 %v1592, %v1741
      %v1743 = vpop.f32.mrb[0].mxu0
      %v1744 = vadd.f32 %v1588, %v1743
      %v1745 = vpop.f32.mrb[0].mxu0
      %v1746 = vadd.f32 %v1592, %v1745
      %1747 = vmatprep.mubr.bf16.mxu0 0
      %1748 = vmatmul.mubr.bf16.gmra.mrb[0].mxu0 %v1539
      %v1749 = vpop.f32.mrb[0].mxu0
      %v1750 = vadd.f32 %v1588, %v1749
      %v1751 = vpop.f32.mrb[0].mxu0
      %v1752 = vadd.f32 %v1592, %v1751
      %v1753 = vpop.f32.mrb[0].mxu0
      %v1754 = vadd.f32 %v1588, %v1753
      %v1755 = vpop.f32.mrb[0].mxu0
      %v1756 = vadd.f32 %v1592, %v1755
      %1757 = vmatprep.mubr.bf16.mxu0 0
      %1758 = vmatmul.mubr.bf16.gmra.mrb[0].mxu0 %v1540
      %v1759 = vpop.f32.mrb[0].mxu0
      %v1760 = vadd.f32 %v1588, %v1759
      %v1761 = vpop.f32.mrb[0].mxu0
      %v1762 = vadd.f32 %v1592, %v1761
      %v1763 = vpop.f32.mrb[0].mxu0
      %v1764 = vadd.f32 %v1588, %v1763
      %v1765 = vpop.f32.mrb[0].mxu0
      %v1766 = vadd.f32 %v1592, %v1765
      %1767 = vmatprep.mubr.bf16.mxu0 0
      %1768 = vmatmul.mubr.bf16.gmra.mrb[0].mxu0 %v1541
      %v1769 = vpop.f32.mrb[0].mxu0
      %v1770 = vadd.f32 %v1588, %v1769
      %v1771 = vpop.f32.mrb[0].mxu0
      %v1772 = vadd.f32 %v1592, %v1771
      %v1773 = vpop.f32.mrb[0].mxu0
      %v1774 = vadd.f32 %v1588, %v1773
      %v1775 = vpop.f32.mrb[0].mxu0
      %v1776 = vadd.f32 %v1592, %v1775
      %1777 = vmatprep.mubr.bf16.mxu0 0
      %1778 = vmatmul.mubr.bf16.gmra.mrb[0].mxu0 %v1542
      %v1779 = vpop.f32.mrb[0].mxu0
      %v1780 = vadd.f32 %v1588, %v1779
      %v1781 = vpop.f32.mrb[0].mxu0
      %v1782 = vadd.f32 %v1592, %v1781
      %v1783 = vpop.f32.mrb[0].mxu0
      %v1784 = vadd.f32 %v1588, %v1783
      %v1785 = vpop.f32.mrb[0].mxu0
      %v1786 = vadd.f32 %v1592, %v1785
      %1787 = vmatprep.mubr.bf16.mxu0 0
      %1788 = vmatmul.mubr.bf16.gmra.mrb[0].mxu0 %v1543
      %v1789 = vpop.f32.mrb[0].mxu0
      %v1790 = vadd.f32 %v1588, %v1789
      %v1791 = vpop.f32.mrb[0].mxu0
      %v1792 = vadd.f32 %v1592, %v1791
      %v1793 = vpop.f32.mrb[0].mxu0
      %v1794 = vadd.f32 %v1588, %v1793
      %v1795 = vpop.f32.mrb[0].mxu0
      %v1796 = vadd.f32 %v1592, %v1795
      %1797 = vmatprep.mubr.bf16.mxu0 0
      %1798 = vmatmul.mubr.bf16.gmra.mrb[0].mxu0 %v1544
      %v1799 = vpop.f32.mrb[0].mxu0
      %v1800 = vadd.f32 %v1588, %v1799
      %v1801 = vpop.f32.mrb[0].mxu0
      %v1802 = vadd.f32 %v1592, %v1801
      %v1803 = vpop.f32.mrb[0].mxu0
      %v1804 = vadd.f32 %v1588, %v1803
      %v1805 = vpop.f32.mrb[0].mxu0
      %v1806 = vadd.f32 %v1592, %v1805
      %1807 = vmatprep.mubr.bf16.mxu0 0
      %1808 = vmatmul.mubr.bf16.gmra.mrb[0].mxu0 %v1545
      %v1809 = vpop.f32.mrb[0].mxu0
      %v1810 = vadd.f32 %v1588, %v1809
      %v1811 = vpop.f32.mrb[0].mxu0
      %v1812 = vadd.f32 %v1592, %v1811
      %v1813 = vpop.f32.mrb[0].mxu0
      %v1814 = vadd.f32 %v1588, %v1813
      %v1815 = vpop.f32.mrb[0].mxu0
      %v1816 = vadd.f32 %v1592, %v1815
      %1817 = vmatprep.mubr.bf16.mxu0 0
      %1818 = vmatmul.mubr.bf16.gmra.mrb[0].mxu0 %v1546
      %v1819 = vpop.f32.mrb[0].mxu0
      %v1820 = vadd.f32 %v1588, %v1819
      %v1821 = vpop.f32.mrb[0].mxu0
      %v1822 = vadd.f32 %v1592, %v1821
      %v1823 = vpop.f32.mrb[0].mxu0
      %v1824 = vadd.f32 %v1588, %v1823
      %v1825 = vpop.f32.mrb[0].mxu0
      %v1826 = vadd.f32 %v1592, %v1825
      %1827 = vmatprep.mubr.bf16.mxu0 0
      %1828 = vmatmul.mubr.bf16.gmra.mrb[0].mxu0 %v1547
      %v1829 = vpop.f32.mrb[0].mxu0
      %v1830 = vadd.f32 %v1588, %v1829
      %v1831 = vpop.f32.mrb[0].mxu0
      %v1832 = vadd.f32 %v1592, %v1831
      %v1833 = vpop.f32.mrb[0].mxu0
      %v1834 = vadd.f32 %v1588, %v1833
      %v1835 = vpop.f32.mrb[0].mxu0
      %v1836 = vadd.f32 %v1592, %v1835
      %1837 = vmatprep.mubr.bf16.mxu0 0
      %1838 = vmatmul.mubr.bf16.gmra.mrb[0].mxu0 %v1548
      %v1839 = vpop.f32.mrb[0].mxu0
      %v1840 = vadd.f32 %v1588, %v1839
      %v1841 = vpop.f32.mrb[0].mxu0
      %v1842 = vadd.f32 %v1592, %v1841
      %v1843 = vpop.f32.mrb[0].mxu0
      %v1844 = vadd.f32 %v1588, %v1843
      %v1845 = vpop.f32.mrb[0].mxu0
      %v1846 = vadd.f32 %v1592, %v1845
      %1847 = vmatprep.mubr.bf16.mxu0 0
      %1848 = vmatmul.mubr.bf16.gmra.mrb[0].mxu0 %v1549
      %v1849 = vpop.f32.mrb[0].mxu0
      %v1850 = vadd.f32 %v1588, %v1849
      %v1851 = vpop.f32.mrb[0].mxu0
      %v1852 = vadd.f32 %v1592, %v1851
      %v1853 = vpop.f32.mrb[0].mxu0
      %v1854 = vadd.f32 %v1588, %v1853
      %v1855 = vpop.f32.mrb[0].mxu0
      %v1856 = vadd.f32 %v1592, %v1855
      %1857 = vmatprep.mubr.bf16.mxu0 0
      %1858 = vmatmul.mubr.bf16.gmra.mrb[0].mxu0 %v1550
      %v1859 = vpop.f32.mrb[0].mxu0
      %v1860 = vadd.f32 %v1588, %v1859
      %v1861 = vpop.f32.mrb[0].mxu0
      %v1862 = vadd.f32 %v1592, %v1861
      %v1863 = vpop.f32.mrb[0].mxu0
      %v1864 = vadd.f32 %v1588, %v1863
      %v1865 = vpop.f32.mrb[0].mxu0
      %v1866 = vadd.f32 %v1592, %v1865
      %1867 = vmatprep.mubr.bf16.mxu0 0
      %1868 = vmatmul.mubr.bf16.gmra.mrb[0].mxu0 %v1551
      %v1869 = vpop.f32.mrb[0].mxu0
      %v1870 = vadd.f32 %v1588, %v1869
      %v1871 = vpop.f32.mrb[0].mxu0
      %v1872 = vadd.f32 %v1592, %v1871
      %v1873 = vpop.f32.mrb[0].mxu0
      %v1874 = vadd.f32 %v1588, %v1873
      %v1875 = vpop.f32.mrb[0].mxu0
      %v1876 = vadd.f32 %v1592, %v1875
      %1877 = vmatprep.mubr.bf16.mxu0 0
      %1878 = vmatmul.mubr.bf16.gmra.mrb[0].mxu0 %v1552
      %v1879 = vpop.f32.mrb[0].mxu0
      %v1880 = vadd.f32 %v1588, %v1879
      %v1881 = vpop.f32.mrb[0].mxu0
      %v1882 = vadd.f32 %v1592, %v1881
      %v1883 = vpop.f32.mrb[0].mxu0
      %v1884 = vadd.f32 %v1588, %v1883
      %v1885 = vpop.f32.mrb[0].mxu0
      %v1886 = vadd.f32 %v1592, %v1885
      %1887 = vmatprep.mubr.bf16.mxu0 0
      %1888 = vmatmul.mubr.bf16.gmra.mrb[0].mxu0 %v1553
      %v1889 = vpop.f32.mrb[0].mxu0
      %v1890 = vadd.f32 %v1588, %v1889
      %v1891 = vpop.f32.mrb[0].mxu0
      %v1892 = vadd.f32 %v1592, %v1891
      %v1893 = vpop.f32.mrb[0].mxu0
      %v1894 = vadd.f32 %v1588, %v1893
      %v1895 = vpop.f32.mrb[0].mxu0
      %v1896 = vadd.f32 %v1592, %v1895
      %1897 = vmatprep.mubr.bf16.mxu0 0
      %1898 = vmatmul.mubr.bf16.gmra.mrb[0].mxu0 %v1554
      %v1899 = vpop.f32.mrb[0].mxu0
      %v1900 = vadd.f32 %v1588, %v1899
      %v1901 = vpop.f32.mrb[0].mxu0
      %v1902 = vadd.f32 %v1592, %v1901
      %v1903 = vpop.f32.mrb[0].mxu0
      %v1904 = vadd.f32 %v1588, %v1903
      %v1905 = vpop.f32.mrb[0].mxu0
      %v1906 = vadd.f32 %v1592, %v1905
      %1907 = vmatprep.mubr.bf16.mxu0 0
      %1908 = vmatmul.mubr.bf16.gmra.mrb[0].mxu0 %v1555
      %v1909 = vpop.f32.mrb[0].mxu0
      %v1910 = vadd.f32 %v1588, %v1909
      %v1911 = vpop.f32.mrb[0].mxu0
      %v1912 = vadd.f32 %v1592, %v1911
      %v1913 = vpop.f32.mrb[0].mxu0
      %v1914 = vadd.f32 %v1588, %v1913
      %v1915 = vpop.f32.mrb[0].mxu0
      %v1916 = vadd.f32 %v1592, %v1915
      %1917 = vmatprep.mubr.bf16.mxu0 0
      %1918 = vmatmul.mubr.bf16.gmra.mrb[0].mxu0 %v1556
      %v1919 = vpop.f32.mrb[0].mxu0
      %v1920 = vadd.f32 %v1588, %v1919
      %v1921 = vpop.f32.mrb[0].mxu0
      %v1922 = vadd.f32 %v1592, %v1921
      %v1923 = vpop.f32.mrb[0].mxu0
      %v1924 = vadd.f32 %v1588, %v1923
      %v1925 = vpop.f32.mrb[0].mxu0
      %v1926 = vadd.f32 %v1592, %v1925
      %1927 = vmatprep.mubr.bf16.mxu0 0
      %1928 = vmatmul.mubr.bf16.gmra.mrb[0].mxu0 %v1557
      %v1929 = vpop.f32.mrb[0].mxu0
      %v1930 = vadd.f32 %v1588, %v1929
      %v1931 = vpop.f32.mrb[0].mxu0
      %v1932 = vadd.f32 %v1592, %v1931
      %v1933 = vpop.f32.mrb[0].mxu0
      %v1934 = vadd.f32 %v1588, %v1933
      %v1935 = vpop.f32.mrb[0].mxu0
      %v1936 = vadd.f32 %v1592, %v1935
      %1937 = vmatprep.mubr.bf16.mxu0 0
      %1938 = vmatmul.mubr.bf16.gmra.mrb[0].mxu0 %v1558
      %v1939 = vpop.f32.mrb[0].mxu0
      %v1940 = vadd.f32 %v1588, %v1939
      %v1941 = vpop.f32.mrb[0].mxu0
      %v1942 = vadd.f32 %v1592, %v1941
      %v1943 = vpop.f32.mrb[0].mxu0
      %v1944 = vadd.f32 %v1588, %v1943
      %v1945 = vpop.f32.mrb[0].mxu0
      %v1946 = vadd.f32 %v1592, %v1945
      %1947 = vmatprep.mubr.bf16.mxu0 0
      %1948 = vmatmul.mubr.bf16.gmra.mrb[0].mxu0 %v1559
      %v1949 = vpop.f32.mrb[0].mxu0
      %v1950 = vadd.f32 %v1588, %v1949
      %v1951 = vpop.f32.mrb[0].mxu0
      %v1952 = vadd.f32 %v1592, %v1951
      %v1953 = vpop.f32.mrb[0].mxu0
      %v1954 = vadd.f32 %v1588, %v1953
      %v1955 = vpop.f32.mrb[0].mxu0
      %v1956 = vadd.f32 %v1592, %v1955
      %1957 = vmatprep.mubr.bf16.mxu0 0
      %1958 = vmatmul.mubr.bf16.gmra.mrb[0].mxu0 %v1560
      %v1959 = vpop.f32.mrb[0].mxu0
      %v1960 = vadd.f32 %v1588, %v1959
      %v1961 = vpop.f32.mrb[0].mxu0
      %v1962 = vadd.f32 %v1592, %v1961
      %v1963 = vpop.f32.mrb[0].mxu0
      %v1964 = vadd.f32 %v1588, %v1963
      %v1965 = vpop.f32.mrb[0].mxu0
      %v1966 = vadd.f32 %v1592, %v1965
      %1967 = vmatprep.mubr.bf16.mxu0 0
      %1968 = vmatmul.mubr.bf16.gmra.mrb[0].mxu0 %v1561
      %v1969 = vpop.f32.mrb[0].mxu0
      %v1970 = vadd.f32 %v1588, %v1969
      %v1971 = vpop.f32.mrb[0].mxu0
      %v1972 = vadd.f32 %v1592, %v1971
      %v1973 = vpop.f32.mrb[0].mxu0
      %v1974 = vadd.f32 %v1588, %v1973
      %v1975 = vpop.f32.mrb[0].mxu0
      %v1976 = vadd.f32 %v1592, %v1975
      %1977 = vmatprep.mubr.bf16.mxu0 0
      %1978 = vmatmul.mubr.bf16.gmra.mrb[0].mxu0 %v1562
      %v1979 = vpop.f32.mrb[0].mxu0
      %v1980 = vadd.f32 %v1588, %v1979
      %v1981 = vpop.f32.mrb[0].mxu0
      %v1982 = vadd.f32 %v1592, %v1981
      %v1983 = vpop.f32.mrb[0].mxu0
      %v1984 = vadd.f32 %v1588, %v1983
      %v1985 = vpop.f32.mrb[0].mxu0
      %v1986 = vadd.f32 %v1592, %v1985
      %1987 = vmatprep.mubr.bf16.mxu0 0
      %1988 = vmatmul.mubr.bf16.gmra.mrb[0].mxu0 %v1563
      %v1989 = vpop.f32.mrb[0].mxu0
      %v1990 = vadd.f32 %v1588, %v1989
      %v1991 = vpop.f32.mrb[0].mxu0
      %v1992 = vadd.f32 %v1592, %v1991
      %v1993 = vpop.f32.mrb[0].mxu0
      %v1994 = vadd.f32 %v1588, %v1993
      %v1995 = vpop.f32.mrb[0].mxu0
      %v1996 = vadd.f32 %v1592, %v1995
      %1997 = vmatprep.mubr.bf16.mxu0 0
      %1998 = vmatmul.mubr.bf16.gmra.mrb[0].mxu0 %v1564
      %v1999 = vpop.f32.mrb[0].mxu0
      %v2000 = vadd.f32 %v1588, %v1999
      %v2001 = vpop.f32.mrb[0].mxu0
      %v2002 = vadd.f32 %v1592, %v2001
      %v2003 = vpop.f32.mrb[0].mxu0
      %v2004 = vadd.f32 %v1588, %v2003
      %v2005 = vpop.f32.mrb[0].mxu0
      %v2006 = vadd.f32 %v1592, %v2005
      %2007 = vmatprep.mubr.bf16.mxu0 0
      %2008 = vmatmul.mubr.bf16.gmra.mrb[0].mxu0 %v1565
      %v2009 = vpop.f32.mrb[0].mxu0
      %v2010 = vadd.f32 %v1588, %v2009
      %v2011 = vpop.f32.mrb[0].mxu0
      %v2012 = vadd.f32 %v1592, %v2011
      %v2013 = vpop.f32.mrb[0].mxu0
      %v2014 = vadd.f32 %v1588, %v2013
      %v2015 = vpop.f32.mrb[0].mxu0
      %v2016 = vadd.f32 %v1592, %v2015
      %2017 = vmatprep.mubr.bf16.mxu0 0
      %2018 = vmatmul.mubr.bf16.gmra.mrb[0].mxu0 %v1566
      %v2019 = vpop.f32.mrb[0].mxu0
      %v2020 = vadd.f32 %v1588, %v2019
      %v2021 = vpop.f32.mrb[0].mxu0
      %v2022 = vadd.f32 %v1592, %v2021
      %v2023 = vpop.f32.mrb[0].mxu0
      %v2024 = vadd.f32 %v1588, %v2023
      %v2025 = vpop.f32.mrb[0].mxu0
      %v2026 = vadd.f32 %v1592, %v2025
      %2027 = vdwg.mxu0
      %v2028 = vmax.f32 %v1710, 0.0
      %v2029 = vmax.f32 %v1712, 0.0
      %v2030 = vmax.f32 %v1714, 0.0
      %v2031 = vmax.f32 %v1716, 0.0
      %v2032 = vmax.f32 %v1720, 0.0
      %v2033 = vmax.f32 %v1722, 0.0
      %v2034 = vmax.f32 %v1724, 0.0
      %v2035 = vmax.f32 %v1726, 0.0
      %v2036 = vmax.f32 %v1730, 0.0
      %v2037 = vmax.f32 %v1732, 0.0
      %v2038 = vmax.f32 %v1734, 0.0
      %v2039 = vmax.f32 %v1736, 0.0
      %v2040 = vmax.f32 %v1740, 0.0
      %v2041 = vmax.f32 %v1742, 0.0
      %v2042 = vmax.f32 %v1744, 0.0
      %v2043 = vmax.f32 %v1746, 0.0
      %v2044 = vmax.f32 %v1750, 0.0
      %v2045 = vmax.f32 %v1752, 0.0
      %v2046 = vmax.f32 %v1754, 0.0
      %v2047 = vmax.f32 %v1756, 0.0
      %v2048 = vmax.f32 %v1760, 0.0
      %v2049 = vmax.f32 %v1762, 0.0
      %v2050 = vmax.f32 %v1764, 0.0
      %v2051 = vmax.f32 %v1766, 0.0
      %v2052 = vmax.f32 %v1770, 0.0
      %v2053 = vmax.f32 %v1772, 0.0
      %v2054 = vmax.f32 %v1774, 0.0
      %v2055 = vmax.f32 %v1776, 0.0
      %v2056 = vmax.f32 %v1780, 0.0
      %v2057 = vmax.f32 %v1782, 0.0
      %v2058 = vmax.f32 %v1784, 0.0
      %v2059 = vmax.f32 %v1786, 0.0
      %v2060 = vmax.f32 %v1790, 0.0
      %v2061 = vmax.f32 %v1792, 0.0
      %v2062 = vmax.f32 %v1794, 0.0
      %v2063 = vmax.f32 %v1796, 0.0
      %v2064 = vmax.f32 %v1800, 0.0
      %v2065 = vmax.f32 %v1802, 0.0
      %v2066 = vmax.f32 %v1804, 0.0
      %v2067 = vmax.f32 %v1806, 0.0
      %v2068 = vmax.f32 %v1810, 0.0
      %v2069 = vmax.f32 %v1812, 0.0
      %v2070 = vmax.f32 %v1814, 0.0
      %v2071 = vmax.f32 %v1816, 0.0
      %v2072 = vmax.f32 %v1820, 0.0
      %v2073 = vmax.f32 %v1822, 0.0
      %v2074 = vmax.f32 %v1824, 0.0
      %v2075 = vmax.f32 %v1826, 0.0
      %v2076 = vmax.f32 %v1830, 0.0
      %v2077 = vmax.f32 %v1832, 0.0
      %v2078 = vmax.f32 %v1834, 0.0
      %v2079 = vmax.f32 %v1836, 0.0
      %v2080 = vmax.f32 %v1840, 0.0
      %v2081 = vmax.f32 %v1842, 0.0
      %v2082 = vmax.f32 %v1844, 0.0
      %v2083 = vmax.f32 %v1846, 0.0
      %v2084 = vmax.f32 %v1850, 0.0
      %v2085 = vmax.f32 %v1852, 0.0
      %v2086 = vmax.f32 %v1854, 0.0
      %v2087 = vmax.f32 %v1856, 0.0
      %v2088 = vmax.f32 %v1860, 0.0
      %v2089 = vmax.f32 %v1862, 0.0
      %v2090 = vmax.f32 %v1864, 0.0
      %v2091 = vmax.f32 %v1866, 0.0
      %v2092 = vmax.f32 %v1870, 0.0
      %v2093 = vmax.f32 %v1872, 0.0
      %v2094 = vmax.f32 %v1874, 0.0
      %v2095 = vmax.f32 %v1876, 0.0
      %v2096 = vmax.f32 %v1880, 0.0
      %v2097 = vmax.f32 %v1882, 0.0
      %v2098 = vmax.f32 %v1884, 0.0
      %v2099 = vmax.f32 %v1886, 0.0
      %v2100 = vmax.f32 %v1890, 0.0
      %v2101 = vmax.f32 %v1892, 0.0
      %v2102 = vmax.f32 %v1894, 0.0
      %v2103 = vmax.f32 %v1896, 0.0
      %v2104 = vmax.f32 %v1900, 0.0
      %v2105 = vmax.f32 %v1902, 0.0
      %v2106 = vmax.f32 %v1904, 0.0
      %v2107 = vmax.f32 %v1906, 0.0
      %v2108 = vmax.f32 %v1910, 0.0
      %v2109 = vmax.f32 %v1912, 0.0
      %v2110 = vmax.f32 %v1914, 0.0
      %v2111 = vmax.f32 %v1916, 0.0
      %v2112 = vmax.f32 %v1920, 0.0
      %v2113 = vmax.f32 %v1922, 0.0
      %v2114 = vmax.f32 %v1924, 0.0
      %v2115 = vmax.f32 %v1926, 0.0
      %v2116 = vmax.f32 %v1930, 0.0
      %v2117 = vmax.f32 %v1932, 0.0
      %v2118 = vmax.f32 %v1934, 0.0
      %v2119 = vmax.f32 %v1936, 0.0
      %v2120 = vmax.f32 %v1940, 0.0
      %v2121 = vmax.f32 %v1942, 0.0
      %v2122 = vmax.f32 %v1944, 0.0
      %v2123 = vmax.f32 %v1946, 0.0
      %v2124 = vmax.f32 %v1950, 0.0
      %v2125 = vmax.f32 %v1952, 0.0
      %v2126 = vmax.f32 %v1954, 0.0
      %v2127 = vmax.f32 %v1956, 0.0
      %v2128 = vmax.f32 %v1960, 0.0
      %v2129 = vmax.f32 %v1962, 0.0
      %v2130 = vmax.f32 %v1964, 0.0
      %v2131 = vmax.f32 %v1966, 0.0
      %v2132 = vmax.f32 %v1970, 0.0
      %v2133 = vmax.f32 %v1972, 0.0
      %v2134 = vmax.f32 %v1974, 0.0
      %v2135 = vmax.f32 %v1976, 0.0
      %v2136 = vmax.f32 %v1980, 0.0
      %v2137 = vmax.f32 %v1982, 0.0
      %v2138 = vmax.f32 %v1984, 0.0
      %v2139 = vmax.f32 %v1986, 0.0
      %v2140 = vmax.f32 %v1990, 0.0
      %v2141 = vmax.f32 %v1992, 0.0
      %v2142 = vmax.f32 %v1994, 0.0
      %v2143 = vmax.f32 %v1996, 0.0
      %v2144 = vmax.f32 %v2000, 0.0
      %v2145 = vmax.f32 %v2002, 0.0
      %v2146 = vmax.f32 %v2004, 0.0
      %v2147 = vmax.f32 %v2006, 0.0
      %v2148 = vmax.f32 %v2010, 0.0
      %v2149 = vmax.f32 %v2012, 0.0
      %v2150 = vmax.f32 %v2014, 0.0
      %v2151 = vmax.f32 %v2016, 0.0
      %v2152 = vmax.f32 %v2020, 0.0
      %v2153 = vmax.f32 %v2022, 0.0
      %v2154 = vmax.f32 %v2024, 0.0
      %v2155 = vmax.f32 %v2026, 0.0
      %v2156 = vpack.c.bf16 %v2030, %v2028
      %v2157 = vpack.c.bf16 %v2031, %v2029
      %v2158 = vpack.c.bf16 %v2034, %v2032
      %v2159 = vpack.c.bf16 %v2035, %v2033
      %v2160 = vpack.c.bf16 %v2038, %v2036
      %v2161 = vpack.c.bf16 %v2039, %v2037
      %v2162 = vpack.c.bf16 %v2042, %v2040
      %v2163 = vpack.c.bf16 %v2043, %v2041
      %v2164 = vpack.c.bf16 %v2046, %v2044
      %v2165 = vpack.c.bf16 %v2047, %v2045
      %v2166 = vpack.c.bf16 %v2050, %v2048
      %v2167 = vpack.c.bf16 %v2051, %v2049
      %v2168 = vpack.c.bf16 %v2054, %v2052
      %v2169 = vpack.c.bf16 %v2055, %v2053
      %v2170 = vpack.c.bf16 %v2058, %v2056
      %v2171 = vpack.c.bf16 %v2059, %v2057
      %v2172 = vpack.c.bf16 %v2062, %v2060
      %v2173 = vpack.c.bf16 %v2063, %v2061
      %v2174 = vpack.c.bf16 %v2066, %v2064
      %v2175 = vpack.c.bf16 %v2067, %v2065
      %v2176 = vpack.c.bf16 %v2070, %v2068
      %v2177 = vpack.c.bf16 %v2071, %v2069
      %v2178 = vpack.c.bf16 %v2074, %v2072
      %v2179 = vpack.c.bf16 %v2075, %v2073
      %v2180 = vpack.c.bf16 %v2078, %v2076
      %v2181 = vpack.c.bf16 %v2079, %v2077
      %v2182 = vpack.c.bf16 %v2082, %v2080
      %v2183 = vpack.c.bf16 %v2083, %v2081
      %v2184 = vpack.c.bf16 %v2086, %v2084
      %v2185 = vpack.c.bf16 %v2087, %v2085
      %v2186 = vpack.c.bf16 %v2090, %v2088
      %v2187 = vpack.c.bf16 %v2091, %v2089
      %v2188 = vpack.c.bf16 %v2094, %v2092
      %v2189 = vpack.c.bf16 %v2095, %v2093
      %v2190 = vpack.c.bf16 %v2098, %v2096
      %v2191 = vpack.c.bf16 %v2099, %v2097
      %v2192 = vpack.c.bf16 %v2102, %v2100
      %v2193 = vpack.c.bf16 %v2103, %v2101
      %v2194 = vpack.c.bf16 %v2106, %v2104
      %v2195 = vpack.c.bf16 %v2107, %v2105
      %v2196 = vpack.c.bf16 %v2110, %v2108
      %v2197 = vpack.c.bf16 %v2111, %v2109
      %v2198 = vpack.c.bf16 %v2114, %v2112
      %v2199 = vpack.c.bf16 %v2115, %v2113
      %v2200 = vpack.c.bf16 %v2118, %v2116
      %v2201 = vpack.c.bf16 %v2119, %v2117
      %v2202 = vpack.c.bf16 %v2122, %v2120
      %v2203 = vpack.c.bf16 %v2123, %v2121
      %v2204 = vpack.c.bf16 %v2126, %v2124
      %v2205 = vpack.c.bf16 %v2127, %v2125
      %v2206 = vpack.c.bf16 %v2130, %v2128
      %v2207 = vpack.c.bf16 %v2131, %v2129
      %v2208 = vpack.c.bf16 %v2134, %v2132
      %v2209 = vpack.c.bf16 %v2135, %v2133
      %v2210 = vpack.c.bf16 %v2138, %v2136
      %v2211 = vpack.c.bf16 %v2139, %v2137
      %v2212 = vpack.c.bf16 %v2142, %v2140
      %v2213 = vpack.c.bf16 %v2143, %v2141
      %v2214 = vpack.c.bf16 %v2146, %v2144
      %v2215 = vpack.c.bf16 %v2147, %v2145
      %v2216 = vpack.c.bf16 %v2150, %v2148
      %v2217 = vpack.c.bf16 %v2151, %v2149
      %v2218 = vpack.c.bf16 %v2154, %v2152
      %v2219 = vpack.c.bf16 %v2155, %v2153
      %v2220 = vld [vmem:[%s7] sm:$0xf]
      %v2221 = vld [vmem:[%s7 + $0x4] sm:$0xf]
      %v2222 = vld [vmem:[%s7 + $0x8] sm:$0xf]
      %v2223 = vld [vmem:[%s7 + $0xc] sm:$0xf]
      %v2224 = vld [vmem:[%s7 + $0x10] sm:$0xf]
      %v2225 = vld [vmem:[%s7 + $0x14] sm:$0xf]
      %v2226 = vld [vmem:[%s7 + $0x18] sm:$0xf]
      %v2227 = vld [vmem:[%s7 + $0x1c] sm:$0xf]
      %v2228 = vld [vmem:[%s7 + $0x20] sm:$0xf]
      %v2229 = vld [vmem:[%s7 + $0x24] sm:$0xf]
      %v2230 = vld [vmem:[%s7 + $0x28] sm:$0xf]
      %v2231 = vld [vmem:[%s7 + $0x2c] sm:$0xf]
      %v2232 = vld [vmem:[%s7 + $0x30] sm:$0xf]
      %v2233 = vld [vmem:[%s7 + $0x34] sm:$0xf]
      %v2234 = vld [vmem:[%s7 + $0x38] sm:$0xf]
      %v2235 = vld [vmem:[%s7 + $0x3c] sm:$0xf]
      %v2236 = vld [vmem:[%s7 + $0x40] sm:$0xf]
      %v2237 = vld [vmem:[%s7 + $0x44] sm:$0xf]
      %v2238 = vld [vmem:[%s7 + $0x48] sm:$0xf]
      %v2239 = vld [vmem:[%s7 + $0x4c] sm:$0xf]
      %v2240 = vld [vmem:[%s7 + $0x50] sm:$0xf]
      %v2241 = vld [vmem:[%s7 + $0x54] sm:$0xf]
      %v2242 = vld [vmem:[%s7 + $0x58] sm:$0xf]
      %v2243 = vld [vmem:[%s7 + $0x5c] sm:$0xf]
      %v2244 = vld [vmem:[%s7 + $0x60] sm:$0xf]
      %v2245 = vld [vmem:[%s7 + $0x64] sm:$0xf]
      %v2246 = vld [vmem:[%s7 + $0x68] sm:$0xf]
      %v2247 = vld [vmem:[%s7 + $0x6c] sm:$0xf]
      %v2248 = vld [vmem:[%s7 + $0x70] sm:$0xf]
      %v2249 = vld [vmem:[%s7 + $0x74] sm:$0xf]
      %v2250 = vld [vmem:[%s7 + $0x78] sm:$0xf]
      %v2251 = vld [vmem:[%s7 + $0x7c] sm:$0xf]
      %v2252 = vld [vmem:[%s8] sm:$0x1]
      %v2254 = vlaneseq
      %v2255 = vshrl.u32 %v2254, 7
      %v2256 = vsub.s32 0, %v2255
      %v2257 = vrot.slane %v2252, %v2256
      %v2291 = vunpack.c.l.b16 %v2220
      %v2292 = vunpack.c.l.b16 %v2221
      %v2293 = vunpack.c.l.b16 %v2222
      %v2294 = vunpack.c.l.b16 %v2223
      %v2295 = vunpack.c.l.b16 %v2224
      %v2296 = vunpack.c.l.b16 %v2225
      %v2297 = vunpack.c.l.b16 %v2226
      %v2298 = vunpack.c.l.b16 %v2227
      %v2299 = vunpack.c.l.b16 %v2228
      %v2300 = vunpack.c.l.b16 %v2229
      %v2301 = vunpack.c.l.b16 %v2230
      %v2302 = vunpack.c.l.b16 %v2231
      %v2303 = vunpack.c.l.b16 %v2232
      %v2304 = vunpack.c.l.b16 %v2233
      %v2305 = vunpack.c.l.b16 %v2234
      %v2306 = vunpack.c.l.b16 %v2235
      %v2307 = vunpack.c.l.b16 %v2236
      %v2308 = vunpack.c.l.b16 %v2237
      %v2309 = vunpack.c.l.b16 %v2238
      %v2310 = vunpack.c.l.b16 %v2239
      %v2311 = vunpack.c.l.b16 %v2240
      %v2312 = vunpack.c.l.b16 %v2241
      %v2313 = vunpack.c.l.b16 %v2242
      %v2314 = vunpack.c.l.b16 %v2243
      %v2315 = vunpack.c.l.b16 %v2244
      %v2316 = vunpack.c.l.b16 %v2245
      %v2317 = vunpack.c.l.b16 %v2246
      %v2318 = vunpack.c.l.b16 %v2247
      %v2319 = vunpack.c.l.b16 %v2248
      %v2320 = vunpack.c.l.b16 %v2249
      %v2321 = vunpack.c.l.b16 %v2250
      %v2322 = vunpack.c.l.b16 %v2251
      %v2323 = vpack.c.b16 %v2292, %v2291
      %v2324 = vpack.c.b16 %v2294, %v2293
      %v2325 = vpack.c.b16 %v2296, %v2295
      %v2326 = vpack.c.b16 %v2298, %v2297
      %v2327 = vpack.c.b16 %v2300, %v2299
      %v2328 = vpack.c.b16 %v2302, %v2301
      %v2329 = vpack.c.b16 %v2304, %v2303
      %v2330 = vpack.c.b16 %v2306, %v2305
      %v2331 = vpack.c.b16 %v2308, %v2307
      %v2332 = vpack.c.b16 %v2310, %v2309
      %v2333 = vpack.c.b16 %v2312, %v2311
      %v2334 = vpack.c.b16 %v2314, %v2313
      %v2335 = vpack.c.b16 %v2316, %v2315
      %v2336 = vpack.c.b16 %v2318, %v2317
      %v2337 = vpack.c.b16 %v2320, %v2319
      %v2338 = vpack.c.b16 %v2322, %v2321
      %2355 = vmatprep.subr.bf16.mxu0 0
      %2356 = vmatpush1.bf16.msra.mxu0 %v2323
      %2357 = vmatprep.subr.bf16.mxu0 0
      %2358 = vmatpush1.bf16.msra.mxu0 %v2324
      %2359 = vmatprep.subr.bf16.mxu0 0
      %2360 = vmatpush1.bf16.msra.mxu0 %v2325
      %2361 = vmatprep.subr.bf16.mxu0 0
      %2362 = vmatpush1.bf16.msra.mxu0 %v2326
      %2363 = vmatprep.subr.bf16.mxu0 0
      %2364 = vmatpush1.bf16.msra.mxu0 %v2327
      %2365 = vmatprep.subr.bf16.mxu0 0
      %2366 = vmatpush1.bf16.msra.mxu0 %v2328
      %2367 = vmatprep.subr.bf16.mxu0 0
      %2368 = vmatpush1.bf16.msra.mxu0 %v2329
      %2369 = vmatprep.subr.bf16.mxu0 0
      %2370 = vmatpush1.bf16.msra.mxu0 %v2330
      %2371 = vmatprep.subr.bf16.mxu0 0
      %2372 = vmatpush1.bf16.msra.mxu0 %v2331
      %2373 = vmatprep.subr.bf16.mxu0 0
      %2374 = vmatpush1.bf16.msra.mxu0 %v2332
      %2375 = vmatprep.subr.bf16.mxu0 0
      %2376 = vmatpush1.bf16.msra.mxu0 %v2333
      %2377 = vmatprep.subr.bf16.mxu0 0
      %2378 = vmatpush1.bf16.msra.mxu0 %v2334
      %2379 = vmatprep.subr.bf16.mxu0 0
      %2380 = vmatpush1.bf16.msra.mxu0 %v2335
      %2381 = vmatprep.subr.bf16.mxu0 0
      %2382 = vmatpush1.bf16.msra.mxu0 %v2336
      %2383 = vmatprep.subr.bf16.mxu0 0
      %2384 = vmatpush1.bf16.msra.mxu0 %v2337
      %2385 = vmatprep.subr.bf16.mxu0 0
      %2386 = vmatpush1.bf16.msra.mxu0 %v2338
      %2387 = vmatprep.mubr.bf16.mxu0 %v2157
      %2388 = vmatmul.mubr.bf16.gmra.mrb[0].mxu0 %v2156
      %v2389 = vpop.f32.mrb[0].mxu0
      %v2390 = vadd.f32 %v2257, %v2389
      %v2391 = vpop.f32.mrb[0].mxu0
      %v2392 = vpop.f32.mrb[0].mxu0
      %v2393 = vadd.f32 %v2257, %v2392
      %v2394 = vpop.f32.mrb[0].mxu0
      %2395 = vmatprep.mubr.bf16.mxu0 %v2159
      %2396 = vmatmul.mubr.bf16.gmra.mrb[0].mxu0 %v2158
      %v2397 = vpop.f32.mrb[0].mxu0
      %v2398 = vadd.f32 %v2257, %v2397
      %v2399 = vpop.f32.mrb[0].mxu0
      %v2400 = vpop.f32.mrb[0].mxu0
      %v2401 = vadd.f32 %v2257, %v2400
      %v2402 = vpop.f32.mrb[0].mxu0
      %2403 = vmatprep.mubr.bf16.mxu0 %v2161
      %2404 = vmatmul.mubr.bf16.gmra.mrb[0].mxu0 %v2160
      %v2405 = vpop.f32.mrb[0].mxu0
      %v2406 = vadd.f32 %v2257, %v2405
      %v2407 = vpop.f32.mrb[0].mxu0
      %v2408 = vpop.f32.mrb[0].mxu0
      %v2409 = vadd.f32 %v2257, %v2408
      %v2410 = vpop.f32.mrb[0].mxu0
      %2411 = vmatprep.mubr.bf16.mxu0 %v2163
      %2412 = vmatmul.mubr.bf16.gmra.mrb[0].mxu0 %v2162
      %v2413 = vpop.f32.mrb[0].mxu0
      %v2414 = vadd.f32 %v2257, %v2413
      %v2415 = vpop.f32.mrb[0].mxu0
      %v2416 = vpop.f32.mrb[0].mxu0
      %v2417 = vadd.f32 %v2257, %v2416
      %v2418 = vpop.f32.mrb[0].mxu0
      %2419 = vmatprep.mubr.bf16.mxu0 %v2165
      %2420 = vmatmul.mubr.bf16.gmra.mrb[0].mxu0 %v2164
      %v2421 = vpop.f32.mrb[0].mxu0
      %v2422 = vadd.f32 %v2257, %v2421
      %v2423 = vpop.f32.mrb[0].mxu0
      %v2424 = vpop.f32.mrb[0].mxu0
      %v2425 = vadd.f32 %v2257, %v2424
      %v2426 = vpop.f32.mrb[0].mxu0
      %2427 = vmatprep.mubr.bf16.mxu0 %v2167
      %2428 = vmatmul.mubr.bf16.gmra.mrb[0].mxu0 %v2166
      %v2429 = vpop.f32.mrb[0].mxu0
      %v2430 = vadd.f32 %v2257, %v2429
      %v2431 = vpop.f32.mrb[0].mxu0
      %v2432 = vpop.f32.mrb[0].mxu0
      %v2433 = vadd.f32 %v2257, %v2432
      %v2434 = vpop.f32.mrb[0].mxu0
      %2435 = vmatprep.mubr.bf16.mxu0 %v2169
      %2436 = vmatmul.mubr.bf16.gmra.mrb[0].mxu0 %v2168
      %v2437 = vpop.f32.mrb[0].mxu0
      %v2438 = vadd.f32 %v2257, %v2437
      %v2439 = vpop.f32.mrb[0].mxu0
      %v2440 = vpop.f32.mrb[0].mxu0
      %v2441 = vadd.f32 %v2257, %v2440
      %v2442 = vpop.f32.mrb[0].mxu0
      %2443 = vmatprep.mubr.bf16.mxu0 %v2171
      %2444 = vmatmul.mubr.bf16.gmra.mrb[0].mxu0 %v2170
      %v2445 = vpop.f32.mrb[0].mxu0
      %v2446 = vadd.f32 %v2257, %v2445
      %v2447 = vpop.f32.mrb[0].mxu0
      %v2448 = vpop.f32.mrb[0].mxu0
      %v2449 = vadd.f32 %v2257, %v2448
      %v2450 = vpop.f32.mrb[0].mxu0
      %2451 = vmatprep.mubr.bf16.mxu0 %v2173
      %2452 = vmatmul.mubr.bf16.gmra.mrb[0].mxu0 %v2172
      %v2453 = vpop.f32.mrb[0].mxu0
      %v2454 = vadd.f32 %v2257, %v2453
      %v2455 = vpop.f32.mrb[0].mxu0
      %v2456 = vpop.f32.mrb[0].mxu0
      %v2457 = vadd.f32 %v2257, %v2456
      %v2458 = vpop.f32.mrb[0].mxu0
      %2459 = vmatprep.mubr.bf16.mxu0 %v2175
      %2460 = vmatmul.mubr.bf16.gmra.mrb[0].mxu0 %v2174
      %v2461 = vpop.f32.mrb[0].mxu0
      %v2462 = vadd.f32 %v2257, %v2461
      %v2463 = vpop.f32.mrb[0].mxu0
      %v2464 = vpop.f32.mrb[0].mxu0
      %v2465 = vadd.f32 %v2257, %v2464
      %v2466 = vpop.f32.mrb[0].mxu0
      %2467 = vmatprep.mubr.bf16.mxu0 %v2177
      %2468 = vmatmul.mubr.bf16.gmra.mrb[0].mxu0 %v2176
      %v2469 = vpop.f32.mrb[0].mxu0
      %v2470 = vadd.f32 %v2257, %v2469
      %v2471 = vpop.f32.mrb[0].mxu0
      %v2472 = vpop.f32.mrb[0].mxu0
      %v2473 = vadd.f32 %v2257, %v2472
      %v2474 = vpop.f32.mrb[0].mxu0
      %2475 = vmatprep.mubr.bf16.mxu0 %v2179
      %2476 = vmatmul.mubr.bf16.gmra.mrb[0].mxu0 %v2178
      %v2477 = vpop.f32.mrb[0].mxu0
      %v2478 = vadd.f32 %v2257, %v2477
      %v2479 = vpop.f32.mrb[0].mxu0
      %v2480 = vpop.f32.mrb[0].mxu0
      %v2481 = vadd.f32 %v2257, %v2480
      %v2482 = vpop.f32.mrb[0].mxu0
      %2483 = vmatprep.mubr.bf16.mxu0 %v2181
      %2484 = vmatmul.mubr.bf16.gmra.mrb[0].mxu0 %v2180
      %v2485 = vpop.f32.mrb[0].mxu0
      %v2486 = vadd.f32 %v2257, %v2485
      %v2487 = vpop.f32.mrb[0].mxu0
      %v2488 = vpop.f32.mrb[0].mxu0
      %v2489 = vadd.f32 %v2257, %v2488
      %v2490 = vpop.f32.mrb[0].mxu0
      %2491 = vmatprep.mubr.bf16.mxu0 %v2183
      %2492 = vmatmul.mubr.bf16.gmra.mrb[0].mxu0 %v2182
      %v2493 = vpop.f32.mrb[0].mxu0
      %v2494 = vadd.f32 %v2257, %v2493
      %v2495 = vpop.f32.mrb[0].mxu0
      %v2496 = vpop.f32.mrb[0].mxu0
      %v2497 = vadd.f32 %v2257, %v2496
      %v2498 = vpop.f32.mrb[0].mxu0
      %2499 = vmatprep.mubr.bf16.mxu0 %v2185
      %2500 = vmatmul.mubr.bf16.gmra.mrb[0].mxu0 %v2184
      %v2501 = vpop.f32.mrb[0].mxu0
      %v2502 = vadd.f32 %v2257, %v2501
      %v2503 = vpop.f32.mrb[0].mxu0
      %v2504 = vpop.f32.mrb[0].mxu0
      %v2505 = vadd.f32 %v2257, %v2504
      %v2506 = vpop.f32.mrb[0].mxu0
      %2507 = vmatprep.mubr.bf16.mxu0 %v2187
      %2508 = vmatmul.mubr.bf16.gmra.mrb[0].mxu0 %v2186
      %v2509 = vpop.f32.mrb[0].mxu0
      %v2510 = vadd.f32 %v2257, %v2509
      %v2511 = vpop.f32.mrb[0].mxu0
      %v2512 = vpop.f32.mrb[0].mxu0
      %v2513 = vadd.f32 %v2257, %v2512
      %v2514 = vpop.f32.mrb[0].mxu0
      %2515 = vmatprep.mubr.bf16.mxu0 %v2189
      %2516 = vmatmul.mubr.bf16.gmra.mrb[0].mxu0 %v2188
      %v2517 = vpop.f32.mrb[0].mxu0
      %v2518 = vadd.f32 %v2257, %v2517
      %v2519 = vpop.f32.mrb[0].mxu0
      %v2520 = vpop.f32.mrb[0].mxu0
      %v2521 = vadd.f32 %v2257, %v2520
      %v2522 = vpop.f32.mrb[0].mxu0
      %2523 = vmatprep.mubr.bf16.mxu0 %v2191
      %2524 = vmatmul.mubr.bf16.gmra.mrb[0].mxu0 %v2190
      %v2525 = vpop.f32.mrb[0].mxu0
      %v2526 = vadd.f32 %v2257, %v2525
      %v2527 = vpop.f32.mrb[0].mxu0
      %v2528 = vpop.f32.mrb[0].mxu0
      %v2529 = vadd.f32 %v2257, %v2528
      %v2530 = vpop.f32.mrb[0].mxu0
      %2531 = vmatprep.mubr.bf16.mxu0 %v2193
      %2532 = vmatmul.mubr.bf16.gmra.mrb[0].mxu0 %v2192
      %v2533 = vpop.f32.mrb[0].mxu0
      %v2534 = vadd.f32 %v2257, %v2533
      %v2535 = vpop.f32.mrb[0].mxu0
      %v2536 = vpop.f32.mrb[0].mxu0
      %v2537 = vadd.f32 %v2257, %v2536
      %v2538 = vpop.f32.mrb[0].mxu0
      %2539 = vmatprep.mubr.bf16.mxu0 %v2195
      %2540 = vmatmul.mubr.bf16.gmra.mrb[0].mxu0 %v2194
      %v2541 = vpop.f32.mrb[0].mxu0
      %v2542 = vadd.f32 %v2257, %v2541
      %v2543 = vpop.f32.mrb[0].mxu0
      %v2544 = vpop.f32.mrb[0].mxu0
      %v2545 = vadd.f32 %v2257, %v2544
      %v2546 = vpop.f32.mrb[0].mxu0
      %2547 = vmatprep.mubr.bf16.mxu0 %v2197
      %2548 = vmatmul.mubr.bf16.gmra.mrb[0].mxu0 %v2196
      %v2549 = vpop.f32.mrb[0].mxu0
      %v2550 = vadd.f32 %v2257, %v2549
      %v2551 = vpop.f32.mrb[0].mxu0
      %v2552 = vpop.f32.mrb[0].mxu0
      %v2553 = vadd.f32 %v2257, %v2552
      %v2554 = vpop.f32.mrb[0].mxu0
      %2555 = vmatprep.mubr.bf16.mxu0 %v2199
      %2556 = vmatmul.mubr.bf16.gmra.mrb[0].mxu0 %v2198
      %v2557 = vpop.f32.mrb[0].mxu0
      %v2558 = vadd.f32 %v2257, %v2557
      %v2559 = vpop.f32.mrb[0].mxu0
      %v2560 = vpop.f32.mrb[0].mxu0
      %v2561 = vadd.f32 %v2257, %v2560
      %v2562 = vpop.f32.mrb[0].mxu0
      %2563 = vmatprep.mubr.bf16.mxu0 %v2201
      %2564 = vmatmul.mubr.bf16.gmra.mrb[0].mxu0 %v2200
      %v2565 = vpop.f32.mrb[0].mxu0
      %v2566 = vadd.f32 %v2257, %v2565
      %v2567 = vpop.f32.mrb[0].mxu0
      %v2568 = vpop.f32.mrb[0].mxu0
      %v2569 = vadd.f32 %v2257, %v2568
      %v2570 = vpop.f32.mrb[0].mxu0
      %2571 = vmatprep.mubr.bf16.mxu0 %v2203
      %2572 = vmatmul.mubr.bf16.gmra.mrb[0].mxu0 %v2202
      %v2573 = vpop.f32.mrb[0].mxu0
      %v2574 = vadd.f32 %v2257, %v2573
      %v2575 = vpop.f32.mrb[0].mxu0
      %v2576 = vpop.f32.mrb[0].mxu0
      %v2577 = vadd.f32 %v2257, %v2576
      %v2578 = vpop.f32.mrb[0].mxu0
      %2579 = vmatprep.mubr.bf16.mxu0 %v2205
      %2580 = vmatmul.mubr.bf16.gmra.mrb[0].mxu0 %v2204
      %v2581 = vpop.f32.mrb[0].mxu0
      %v2582 = vadd.f32 %v2257, %v2581
      %v2583 = vpop.f32.mrb[0].mxu0
      %v2584 = vpop.f32.mrb[0].mxu0
      %v2585 = vadd.f32 %v2257, %v2584
      %v2586 = vpop.f32.mrb[0].mxu0
      %2587 = vmatprep.mubr.bf16.mxu0 %v2207
      %2588 = vmatmul.mubr.bf16.gmra.mrb[0].mxu0 %v2206
      %v2589 = vpop.f32.mrb[0].mxu0
      %v2590 = vadd.f32 %v2257, %v2589
      %v2591 = vpop.f32.mrb[0].mxu0
      %v2592 = vpop.f32.mrb[0].mxu0
      %v2593 = vadd.f32 %v2257, %v2592
      %v2594 = vpop.f32.mrb[0].mxu0
      %2595 = vmatprep.mubr.bf16.mxu0 %v2209
      %2596 = vmatmul.mubr.bf16.gmra.mrb[0].mxu0 %v2208
      %v2597 = vpop.f32.mrb[0].mxu0
      %v2598 = vadd.f32 %v2257, %v2597
      %v2599 = vpop.f32.mrb[0].mxu0
      %v2600 = vpop.f32.mrb[0].mxu0
      %v2601 = vadd.f32 %v2257, %v2600
      %v2602 = vpop.f32.mrb[0].mxu0
      %2603 = vmatprep.mubr.bf16.mxu0 %v2211
      %2604 = vmatmul.mubr.bf16.gmra.mrb[0].mxu0 %v2210
      %v2605 = vpop.f32.mrb[0].mxu0
      %v2606 = vadd.f32 %v2257, %v2605
      %v2607 = vpop.f32.mrb[0].mxu0
      %v2608 = vpop.f32.mrb[0].mxu0
      %v2609 = vadd.f32 %v2257, %v2608
      %v2610 = vpop.f32.mrb[0].mxu0
      %2611 = vmatprep.mubr.bf16.mxu0 %v2213
      %2612 = vmatmul.mubr.bf16.gmra.mrb[0].mxu0 %v2212
      %v2613 = vpop.f32.mrb[0].mxu0
      %v2614 = vadd.f32 %v2257, %v2613
      %v2615 = vpop.f32.mrb[0].mxu0
      %v2616 = vpop.f32.mrb[0].mxu0
      %v2617 = vadd.f32 %v2257, %v2616
      %v2618 = vpop.f32.mrb[0].mxu0
      %2619 = vmatprep.mubr.bf16.mxu0 %v2215
      %2620 = vmatmul.mubr.bf16.gmra.mrb[0].mxu0 %v2214
      %v2621 = vpop.f32.mrb[0].mxu0
      %v2622 = vadd.f32 %v2257, %v2621
      %v2623 = vpop.f32.mrb[0].mxu0
      %v2624 = vpop.f32.mrb[0].mxu0
      %v2625 = vadd.f32 %v2257, %v2624
      %v2626 = vpop.f32.mrb[0].mxu0
      %2627 = vmatprep.mubr.bf16.mxu0 %v2217
      %2628 = vmatmul.mubr.bf16.gmra.mrb[0].mxu0 %v2216
      %v2629 = vpop.f32.mrb[0].mxu0
      %v2630 = vadd.f32 %v2257, %v2629
      %v2631 = vpop.f32.mrb[0].mxu0
      %v2632 = vpop.f32.mrb[0].mxu0
      %v2633 = vadd.f32 %v2257, %v2632
      %v2634 = vpop.f32.mrb[0].mxu0
      %2635 = vmatprep.mubr.bf16.mxu0 %v2219
      %2636 = vmatmul.mubr.bf16.gmra.mrb[0].mxu0 %v2218
      %v2637 = vpop.f32.mrb[0].mxu0
      %v2638 = vadd.f32 %v2257, %v2637
      %v2639 = vpop.f32.mrb[0].mxu0
      %v2640 = vpop.f32.mrb[0].mxu0
      %v2641 = vadd.f32 %v2257, %v2640
      %v2642 = vpop.f32.mrb[0].mxu0
      %2643 = vdwg.mxu0
      %v2644 = vadd.f32 %v1281, %v2390
      %v2645 = vadd.f32 %v1284, %v2393
      %v2646 = vadd.f32 %v1289, %v2398
      %v2647 = vadd.f32 %v1292, %v2401
      %v2648 = vadd.f32 %v1297, %v2406
      %v2649 = vadd.f32 %v1300, %v2409
      %v2650 = vadd.f32 %v1305, %v2414
      %v2651 = vadd.f32 %v1308, %v2417
      %v2652 = vadd.f32 %v1313, %v2422
      %v2653 = vadd.f32 %v1316, %v2425
      %v2654 = vadd.f32 %v1321, %v2430
      %v2655 = vadd.f32 %v1324, %v2433
      %v2656 = vadd.f32 %v1329, %v2438
      %v2657 = vadd.f32 %v1332, %v2441
      %v2658 = vadd.f32 %v1337, %v2446
      %v2659 = vadd.f32 %v1340, %v2449
      %v2660 = vadd.f32 %v1345, %v2454
      %v2661 = vadd.f32 %v1348, %v2457
      %v2662 = vadd.f32 %v1353, %v2462
      %v2663 = vadd.f32 %v1356, %v2465
      %v2664 = vadd.f32 %v1361, %v2470
      %v2665 = vadd.f32 %v1364, %v2473
      %v2666 = vadd.f32 %v1369, %v2478
      %v2667 = vadd.f32 %v1372, %v2481
      %v2668 = vadd.f32 %v1377, %v2486
      %v2669 = vadd.f32 %v1380, %v2489
      %v2670 = vadd.f32 %v1385, %v2494
      %v2671 = vadd.f32 %v1388, %v2497
      %v2672 = vadd.f32 %v1393, %v2502
      %v2673 = vadd.f32 %v1396, %v2505
      %v2674 = vadd.f32 %v1401, %v2510
      %v2675 = vadd.f32 %v1404, %v2513
      %v2676 = vadd.f32 %v1409, %v2518
      %v2677 = vadd.f32 %v1412, %v2521
      %v2678 = vadd.f32 %v1417, %v2526
      %v2679 = vadd.f32 %v1420, %v2529
      %v2680 = vadd.f32 %v1425, %v2534
      %v2681 = vadd.f32 %v1428, %v2537
      %v2682 = vadd.f32 %v1433, %v2542
      %v2683 = vadd.f32 %v1436, %v2545
      %v2684 = vadd.f32 %v1441, %v2550
      %v2685 = vadd.f32 %v1444, %v2553
      %v2686 = vadd.f32 %v1449, %v2558
      %v2687 = vadd.f32 %v1452, %v2561
      %v2688 = vadd.f32 %v1457, %v2566
      %v2689 = vadd.f32 %v1460, %v2569
      %v2690 = vadd.f32 %v1465, %v2574
      %v2691 = vadd.f32 %v1468, %v2577
      %v2692 = vadd.f32 %v1473, %v2582
      %v2693 = vadd.f32 %v1476, %v2585
      %v2694 = vadd.f32 %v1481, %v2590
      %v2695 = vadd.f32 %v1484, %v2593
      %v2696 = vadd.f32 %v1489, %v2598
      %v2697 = vadd.f32 %v1492, %v2601
      %v2698 = vadd.f32 %v1497, %v2606
      %v2699 = vadd.f32 %v1500, %v2609
      %v2700 = vadd.f32 %v1505, %v2614
      %v2701 = vadd.f32 %v1508, %v2617
      %v2702 = vadd.f32 %v1513, %v2622
      %v2703 = vadd.f32 %v1516, %v2625
      %v2704 = vadd.f32 %v1521, %v2630
      %v2705 = vadd.f32 %v1524, %v2633
      %v2706 = vadd.f32 %v1529, %v2638
      %v2707 = vadd.f32 %v1532, %v2641
      %2708 = vst [vmem:[%s334] sm:$0xff] %v2644
      %2709 = vst [vmem:[%s334 + $0x8] sm:$0xff] %v2645
      %2710 = vst [vmem:[%s334 + $0x10] sm:$0xff] %v2646
      %2711 = vst [vmem:[%s334 + $0x18] sm:$0xff] %v2647
      %2712 = vst [vmem:[%s334 + $0x20] sm:$0xff] %v2648
      %2713 = vst [vmem:[%s334 + $0x28] sm:$0xff] %v2649
      %2714 = vst [vmem:[%s334 + $0x30] sm:$0xff] %v2650
      %2715 = vst [vmem:[%s334 + $0x38] sm:$0xff] %v2651
      %2716 = vst [vmem:[%s334 + $0x40] sm:$0xff] %v2652
      %2717 = vst [vmem:[%s334 + $0x48] sm:$0xff] %v2653
      %2718 = vst [vmem:[%s334 + $0x50] sm:$0xff] %v2654
      %2719 = vst [vmem:[%s334 + $0x58] sm:$0xff] %v2655
      %2720 = vst [vmem:[%s334 + $0x60] sm:$0xff] %v2656
      %2721 = vst [vmem:[%s334 + $0x68] sm:$0xff] %v2657
      %2722 = vst [vmem:[%s334 + $0x70] sm:$0xff] %v2658
      %2723 = vst [vmem:[%s334 + $0x78] sm:$0xff] %v2659
      %2724 = vst [vmem:[%s334 + $0x80] sm:$0xff] %v2660
      %2725 = vst [vmem:[%s334 + $0x88] sm:$0xff] %v2661
      %2726 = vst [vmem:[%s334 + $0x90] sm:$0xff] %v2662
      %2727 = vst [vmem:[%s334 + $0x98] sm:$0xff] %v2663
      %2728 = vst [vmem:[%s334 + $0xa0] sm:$0xff] %v2664
      %2729 = vst [vmem:[%s334 + $0xa8] sm:$0xff] %v2665
      %2730 = vst [vmem:[%s334 + $0xb0] sm:$0xff] %v2666
      %2731 = vst [vmem:[%s334 + $0xb8] sm:$0xff] %v2667
      %2732 = vst [vmem:[%s334 + $0xc0] sm:$0xff] %v2668
      %2733 = vst [vmem:[%s334 + $0xc8] sm:$0xff] %v2669
      %2734 = vst [vmem:[%s334 + $0xd0] sm:$0xff] %v2670
      %2735 = vst [vmem:[%s334 + $0xd8] sm:$0xff] %v2671
      %2736 = vst [vmem:[%s334 + $0xe0] sm:$0xff] %v2672
      %2737 = vst [vmem:[%s334 + $0xe8] sm:$0xff] %v2673
      %2738 = vst [vmem:[%s334 + $0xf0] sm:$0xff] %v2674
      %2739 = vst [vmem:[%s334 + $0xf8] sm:$0xff] %v2675
      %2740 = vst [vmem:[%s334 + $0x100] sm:$0xff] %v2676
      %2741 = vst [vmem:[%s334 + $0x108] sm:$0xff] %v2677
      %2742 = vst [vmem:[%s334 + $0x110] sm:$0xff] %v2678
      %2743 = vst [vmem:[%s334 + $0x118] sm:$0xff] %v2679
      %2744 = vst [vmem:[%s334 + $0x120] sm:$0xff] %v2680
      %2745 = vst [vmem:[%s334 + $0x128] sm:$0xff] %v2681
      %2746 = vst [vmem:[%s334 + $0x130] sm:$0xff] %v2682
      %2747 = vst [vmem:[%s334 + $0x138] sm:$0xff] %v2683
      %2748 = vst [vmem:[%s334 + $0x140] sm:$0xff] %v2684
      %2749 = vst [vmem:[%s334 + $0x148] sm:$0xff] %v2685
      %2750 = vst [vmem:[%s334 + $0x150] sm:$0xff] %v2686
      %2751 = vst [vmem:[%s334 + $0x158] sm:$0xff] %v2687
      %2752 = vst [vmem:[%s334 + $0x160] sm:$0xff] %v2688
      %2753 = vst [vmem:[%s334 + $0x168] sm:$0xff] %v2689
      %2754 = vst [vmem:[%s334 + $0x170] sm:$0xff] %v2690
      %2755 = vst [vmem:[%s334 + $0x178] sm:$0xff] %v2691
      %2756 = vst [vmem:[%s334 + $0x180] sm:$0xff] %v2692
      %2757 = vst [vmem:[%s334 + $0x188] sm:$0xff] %v2693
      %2758 = vst [vmem:[%s334 + $0x190] sm:$0xff] %v2694
      %2759 = vst [vmem:[%s334 + $0x198] sm:$0xff] %v2695
      %2760 = vst [vmem:[%s334 + $0x1a0] sm:$0xff] %v2696
      %2761 = vst [vmem:[%s334 + $0x1a8] sm:$0xff] %v2697
      %2762 = vst [vmem:[%s334 + $0x1b0] sm:$0xff] %v2698
      %2763 = vst [vmem:[%s334 + $0x1b8] sm:$0xff] %v2699
      %2764 = vst [vmem:[%s334 + $0x1c0] sm:$0xff] %v2700
      %2765 = vst [vmem:[%s334 + $0x1c8] sm:$0xff] %v2701
      %2766 = vst [vmem:[%s334 + $0x1d0] sm:$0xff] %v2702
      %2767 = vst [vmem:[%s334 + $0x1d8] sm:$0xff] %v2703
      %2768 = vst [vmem:[%s334 + $0x1e0] sm:$0xff] %v2704
      %2769 = vst [vmem:[%s334 + $0x1e8] sm:$0xff] %v2705
      %2770 = vst [vmem:[%s334 + $0x1f0] sm:$0xff] %v2706
      %2771 = vst [vmem:[%s334 + $0x1f8] sm:$0xff] %v2707
      %s2772 = smul.u32 64, %s20
      %p2773 = scmp.lt.s32.totalorder %s2772, 127
      %s2774 = scalar_select %p2773, %s2772, 127
      %s2775 = smul.addr %s2774, 8
      %s2776 = scalar_lea.vmem %s9, %s2775
      // Predicated region
      $region57: #{autoencoder_forward.1} parent=55 // pred_check
        %p2777 = pneg %p232
      $region58: #{autoencoder_forward.1} parent=55 // pred_check_branch
        %2779 = sbr.rel (%p2777) target = $region60
      $region59: #{autoencoder_forward.1} parent=55 // pred_region
        %s2780 = smul.u32 64, %s20
      $region60: #{autoencoder_forward.1} parent=55 // pred_fallthru
        _
    $region56: #{autoencoder_forward.1} parent=5 // pred_fallthru
      _
    %p2781 = scmp.le.s32.totalorder 2, %s15
    // Predicated region
    $region61: #{autoencoder_forward.1} parent=5 // pred_check
      %p2782 = pneg %p2781
    $region62: #{autoencoder_forward.1} parent=5 // pred_check_branch
      %2784 = sbr.rel (%p2782) target = $region64
    $region63: #{autoencoder_forward.1} parent=5 // pred_region
      %s2785 = ssub.s32 %s15, 2
      // Predicated region
      $region65: #{autoencoder_forward.1} parent=63 // pred_check
        %p2786 = pneg %p238
      $region66: #{autoencoder_forward.1} parent=63 // pred_check_branch
        %2788 = sbr.rel (%p2786) target = $region68
      $region67: #{autoencoder_forward.1} parent=63 // pred_region
        %s2789 = smul.u32 64, %s21
        %p2790 = scmp.lt.s32.totalorder %s2789, 127
        %s2791 = scalar_select %p2790, %s2789, 127
        %s2792 = smul.addr %s2791, 8
        %s2793 = scalar_lea.vmem %s9, %s2792
      $region68: #{autoencoder_forward.1} parent=63 // pred_fallthru
        _
    $region64: #{autoencoder_forward.1} parent=5 // pred_fallthru
      _
  $region6: #{autoencoder_forward.1} parent=0 // loop_footer
    %s19 = sadd.s32 1, %s15
  $region7: #{autoencoder_forward.1} parent=0 // loop_footer_branch
    %14 = sbr.rel target = $region3
  $region8: #{autoencoder_forward.1} parent=0 // loop_exit
    _

</llo_original>
